<compile_context>
chip_gen: v7x
topology: tpu7x:2x2x1
jax: 0.10.0
libtpu: 0.0.40
codegen_flags: <defaults>
</compile_context>

<pallas_src>
import functools

import jax
import jax.numpy as jnp
from jax.experimental import pallas as pl
from jax.experimental.pallas import tpu as pltpu

LN_EPS = 1e-5  # torch.nn.LayerNorm default


def _layer_norm(y, w, b):
    mu = jnp.mean(y, axis=-1, keepdims=True)
    var = jnp.mean((y - mu) ** 2, axis=-1, keepdims=True)  # biased, as in torch
    return (y - mu) * jax.lax.rsqrt(var + LN_EPS) * w + b


def _vit_kernel(x_ref, emb_wT_ref, emb_b_ref,
                attn_wT_ref, attn_b_ref, ln1_w_ref, ln1_b_ref,
                l1_wT_ref, l1_b_ref, l2_wT_ref, l2_b_ref,
                ln2_w_ref, ln2_b_ref, fc_wT_ref, fc_b_ref,
                out_ref, h_ref):
    """Grid = (batch_tiles, num_layers). One transformer layer per grid step."""
    l = pl.program_id(1)
    cdt = attn_wT_ref.dtype  # matmul operand dtype (f32 or bf16)

    # ---- embedding: only on the first layer step of each batch tile ----
    @pl.when(l == 0)
    def _embed():
        h_ref[...] = (jnp.dot(x_ref[...], emb_wT_ref[...],
                              preferred_element_type=jnp.float32)
                      + emb_b_ref[...])

    h = h_ref[...]                                             # (tb, H) f32

    # ---- self attention, seq_len==1 -> single fused linear map ----
    attn = jnp.dot(h.astype(cdt), attn_wT_ref[...],
                   preferred_element_type=jnp.float32) + attn_b_ref[...]
    h = _layer_norm(h + attn, ln1_w_ref[...], ln1_b_ref[...])

    # ---- feed forward: linear1 -> relu -> linear2 (post-norm) ----
    ff = jnp.dot(h.astype(cdt), l1_wT_ref[...],
                 preferred_element_type=jnp.float32) + l1_b_ref[...]
    ff = jnp.maximum(ff, 0.0)
    ff = jnp.dot(ff.astype(cdt), l2_wT_ref[...],
                 preferred_element_type=jnp.float32) + l2_b_ref[...]
    h = _layer_norm(h + ff, ln2_w_ref[...], ln2_b_ref[...])
    h_ref[...] = h

    # ---- classifier: only on the last layer step (lane-dense padded output) ----
    @pl.when(l == pl.num_programs(1) - 1)
    def _classify():
        out_ref[...] = (jnp.dot(h.astype(cdt), fc_wT_ref[...],
                                preferred_element_type=jnp.float32)
                        + fc_b_ref[...])


def vision_transformer(x, params, *, num_layers, hidden_dim, tb=None,
                       compute_dtype=jnp.float32):
    B, din = x.shape
    H, L = hidden_dim, num_layers
    C = params["fc_w"].shape[0]
    Hff = params["lin1_w"].shape[1]          # dim_feedforward (== H in this module)
    C_pad = ((C + 127) // 128) * 128         # lane-dense output block

    if tb is None:
        tb = min(B, 128)
    assert B % tb == 0 and (tb % 8 == 0 or tb == B)

    f32 = jnp.float32
    # ---------- host-side one-time layout / fusion work (outside the kernel) -------
    emb_wT = params["emb_w"].T.astype(compute_dtype)                 # (Din, H)
    emb_b = params["emb_b"].reshape(1, H).astype(f32)                # (1, H)

    w_v = params["in_w"][:, 2 * H:3 * H, :]                          # (L, H, H)
    b_v = params["in_b"][:, :, 2 * H:3 * H]                          # (L, 1, H)
    w_out, b_out = params["out_w"], params["out_b"]                  # (L,H,H),(L,1,H)
    # attn(h) = out_proj(V(h)) = h @ (W_out @ W_v).T + (b_v @ W_out.T + b_out)
    attn_wT = jnp.swapaxes(jnp.matmul(w_out, w_v), -1, -2).astype(compute_dtype)
    attn_b = (jnp.matmul(b_v, jnp.swapaxes(w_out, -1, -2)) + b_out).astype(f32)

    l1_wT = jnp.swapaxes(params["lin1_w"], -1, -2).astype(compute_dtype)  # (L,H,Hff)
    l1_b = params["lin1_b"].astype(f32)                                   # (L,1,Hff)
    l2_wT = jnp.swapaxes(params["lin2_w"], -1, -2).astype(compute_dtype)  # (L,Hff,H)
    l2_b = params["lin2_b"].astype(f32)
    ln1_w = params["ln1_w"].astype(f32)
    ln1_b = params["ln1_b"].astype(f32)
    ln2_w = params["ln2_w"].astype(f32)
    ln2_b = params["ln2_b"].astype(f32)

    fc_wT = jnp.zeros((H, C_pad), compute_dtype).at[:, :C].set(
        params["fc_w"].T.astype(compute_dtype))
    fc_b = jnp.zeros((1, C_pad), f32).at[:, :C].set(
        params["fc_b"].reshape(1, C).astype(f32))

    x_c = x.astype(compute_dtype)

    args = [x_c, emb_wT, emb_b, attn_wT, attn_b, ln1_w, ln1_b,
            l1_wT, l1_b, l2_wT, l2_b, ln2_w, ln2_b, fc_wT, fc_b]

    per_layer3 = lambda i, l: (l, 0, 0)
    const2 = lambda i, l: (0, 0)
    in_specs = [
        pl.BlockSpec((tb, din), lambda i, l: (i, 0)),     # x
        pl.BlockSpec((din, H), const2),                   # emb_wT   (resident)
        pl.BlockSpec((1, H), const2),                     # emb_b
        pl.BlockSpec((None, H, H), per_layer3),           # attn_wT  (streamed per layer)
        pl.BlockSpec((None, 1, H), per_layer3),           # attn_b
        pl.BlockSpec((None, 1, H), per_layer3),           # ln1_w
        pl.BlockSpec((None, 1, H), per_layer3),           # ln1_b
        pl.BlockSpec((None, H, Hff), per_layer3),         # l1_wT
        pl.BlockSpec((None, 1, Hff), per_layer3),         # l1_b
        pl.BlockSpec((None, Hff, H), per_layer3),         # l2_wT
        pl.BlockSpec((None, 1, H), per_layer3),           # l2_b
        pl.BlockSpec((None, 1, H), per_layer3),           # ln2_w
        pl.BlockSpec((None, 1, H), per_layer3),           # ln2_b
        pl.BlockSpec((H, C_pad), const2),                 # fc_wT    (resident)
        pl.BlockSpec((1, C_pad), const2),                 # fc_b
    ]

    flops = 2 * B * (din * H + L * (H * H + H * Hff + Hff * H) + H * C_pad)
    bytes_accessed = int(sum(a.size * jnp.dtype(a.dtype).itemsize for a in args)
                         + B * C_pad * 4)
    cost = pl.CostEstimate(flops=flops, transcendentals=2 * B * L,
                           bytes_accessed=bytes_accessed)

    out = pl.pallas_call(
        _vit_kernel,
        out_shape=jax.ShapeDtypeStruct((B, C_pad), jnp.float32),
        grid=(B // tb, L),
        in_specs=in_specs,
        out_specs=pl.BlockSpec((tb, C_pad), lambda i, l: (i, 0)),
        scratch_shapes=[pltpu.VMEM((tb, H), jnp.float32)],   # hidden state across layers
        compiler_params=pltpu.CompilerParams(
            dimension_semantics=("parallel", "arbitrary"),
            vmem_limit_bytes=32 * 1024 * 1024),
        cost_estimate=cost,
    )(*args)
    return out[:, :C]


def init_params(key, input_dim, hidden_dim, num_layers, num_classes):
    ks = jax.random.split(key, 8)
    s = 0.05
    H, L = hidden_dim, num_layers
    return {
        "emb_w": jax.random.normal(ks[0], (H, input_dim), jnp.float32) * s,
        "emb_b": jax.random.normal(ks[1], (1, H), jnp.float32) * s,
        "in_w":  jax.random.normal(ks[2], (L, 3 * H, H), jnp.float32) * s,
        "in_b":  jax.random.normal(ks[3], (L, 1, 3 * H), jnp.float32) * s,
        "out_w": jax.random.normal(ks[4], (L, H, H), jnp.float32) * s,
        "out_b": jnp.zeros((L, 1, H), jnp.float32),
        "ln1_w": jnp.ones((L, 1, H), jnp.float32),
        "ln1_b": jnp.zeros((L, 1, H), jnp.float32),
        "lin1_w": jax.random.normal(ks[5], (L, H, H), jnp.float32) * s,
        "lin1_b": jnp.zeros((L, 1, H), jnp.float32),
        "lin2_w": jax.random.normal(ks[6], (L, H, H), jnp.float32) * s,
        "lin2_b": jnp.zeros((L, 1, H), jnp.float32),
        "ln2_w": jnp.ones((L, 1, H), jnp.float32),
        "ln2_b": jnp.zeros((L, 1, H), jnp.float32),
        "fc_w": jax.random.normal(ks[7], (num_classes, H), jnp.float32) * s,
        "fc_b": jnp.zeros((1, num_classes), jnp.float32),
    }


def reference(x, p, *, num_layers, hidden_dim):
    """Pure-JAX mirror of the eval-mode torch forward (unfused, for verification)."""
    H = hidden_dim
    h = x @ p["emb_w"].T + p["emb_b"]
    for l in range(num_layers):
        w_v = p["in_w"][l][2 * H:3 * H, :]
        b_v = p["in_b"][l][:, 2 * H:3 * H]
        v = h @ w_v.T + b_v
        attn = v @ p["out_w"][l].T + p["out_b"][l]
        h = _layer_norm(h + attn, p["ln1_w"][l], p["ln1_b"][l])
        ff = jnp.maximum(h @ p["lin1_w"][l].T + p["lin1_b"][l], 0.0)
        ff = ff @ p["lin2_w"][l].T + p["lin2_b"][l]
        h = _layer_norm(h + ff, p["ln2_w"][l], p["ln2_b"][l])
    return h @ p["fc_w"].T + p["fc_b"]


if __name__ == "__main__":
    input_dim, hidden_dim, num_heads, num_layers, num_classes = 64, 32, 4, 2, 10
    batch = 16

    key = jax.random.PRNGKey(0)
    kx, kp = jax.random.split(key)
    x = jax.random.normal(kx, (batch, input_dim), jnp.float32)
    params = init_params(kp, input_dim, hidden_dim, num_layers, num_classes)

    out = vision_transformer(x, params, num_layers=num_layers,
                             hidden_dim=hidden_dim)
    out = jax.block_until_ready(out)

    ref = reference(x, params, num_layers=num_layers, hidden_dim=hidden_dim)
    assert out.shape == (batch, num_classes)
    assert jnp.allclose(out, ref, atol=1e-4, rtol=1e-4), \
        f"max abs diff = {jnp.max(jnp.abs(out - ref))}"
    print("KERNEL_OK")
</pallas_src>

<mosaic_0001>
module attributes {stable_mosaic.version = 11 : i64} {
  func.func @_vit_kernel(%arg0: i32, %arg1: i32, %arg2: memref<16x64xf32, #tpu.memory_space<vmem>>, %arg3: memref<64x32xf32, #tpu.memory_space<vmem>>, %arg4: memref<1x32xf32, #tpu.memory_space<vmem>>, %arg5: memref<1x32x32xf32, #tpu.memory_space<vmem>>, %arg6: memref<1x1x32xf32, #tpu.memory_space<vmem>>, %arg7: memref<1x1x32xf32, #tpu.memory_space<vmem>>, %arg8: memref<1x1x32xf32, #tpu.memory_space<vmem>>, %arg9: memref<1x32x32xf32, #tpu.memory_space<vmem>>, %arg10: memref<1x1x32xf32, #tpu.memory_space<vmem>>, %arg11: memref<1x32x32xf32, #tpu.memory_space<vmem>>, %arg12: memref<1x1x32xf32, #tpu.memory_space<vmem>>, %arg13: memref<1x1x32xf32, #tpu.memory_space<vmem>>, %arg14: memref<1x1x32xf32, #tpu.memory_space<vmem>>, %arg15: memref<32x128xf32, #tpu.memory_space<vmem>>, %arg16: memref<1x128xf32, #tpu.memory_space<vmem>>, %arg17: memref<16x128xf32, #tpu.memory_space<vmem>>, %arg18: memref<16x32xf32, #tpu.memory_space<vmem>>) attributes {dimension_semantics = [#tpu.dimension_semantics<parallel>, #tpu.dimension_semantics<arbitrary>], iteration_bounds = array<i64: 1, 2>, scalar_prefetch = 0 : i64, scratch_operands = 1 : i64, tpu.core_type = #tpu.core_type<tc>, window_params = [{transform_indices = @transform_0, window_bounds = array<i64: 16, 64>}, {pipeline_mode = #tpu.pipeline_mode<synchronous>, transform_indices = @transform_1, window_bounds = array<i64: 64, 32>}, {pipeline_mode = #tpu.pipeline_mode<synchronous>, transform_indices = @transform_2, window_bounds = array<i64: 1, 32>}, {transform_indices = @transform_3, window_bounds = array<i64: 1, 32, 32>}, {transform_indices = @transform_4, window_bounds = array<i64: 1, 1, 32>}, {transform_indices = @transform_5, window_bounds = array<i64: 1, 1, 32>}, {transform_indices = @transform_6, window_bounds = array<i64: 1, 1, 32>}, {transform_indices = @transform_7, window_bounds = array<i64: 1, 32, 32>}, {transform_indices = @transform_8, window_bounds = array<i64: 1, 1, 32>}, {transform_indices = @transform_9, window_bounds = array<i64: 1, 32, 32>}, {transform_indices = @transform_10, window_bounds = array<i64: 1, 1, 32>}, {transform_indices = @transform_11, window_bounds = array<i64: 1, 1, 32>}, {transform_indices = @transform_12, window_bounds = array<i64: 1, 1, 32>}, {pipeline_mode = #tpu.pipeline_mode<synchronous>, transform_indices = @transform_13, window_bounds = array<i64: 32, 128>}, {pipeline_mode = #tpu.pipeline_mode<synchronous>, transform_indices = @transform_14, window_bounds = array<i64: 1, 128>}, {transform_indices = @transform_15, window_bounds = array<i64: 16, 128>}]} {
    %c0_i32 = arith.constant 0 : i32
    %0 = arith.cmpi eq, %arg1, %c0_i32 : i32
    %1 = arith.extui %0 : i1 to i32
    %c0_i32_0 = arith.constant 0 : i32
    %2 = arith.cmpi ne, %1, %c0_i32_0 : i32
    scf.if %2 {
      %c0_48 = arith.constant 0 : index
      %c0_49 = arith.constant 0 : index
      %85 = vector.load %arg2[%c0_48, %c0_49] : memref<16x64xf32, #tpu.memory_space<vmem>>, vector<16x64xf32>
      %c0_50 = arith.constant 0 : index
      %c0_51 = arith.constant 0 : index
      %86 = vector.load %arg3[%c0_50, %c0_51] : memref<64x32xf32, #tpu.memory_space<vmem>>, vector<64x32xf32>
      %cst_52 = arith.constant dense<0.000000e+00> : vector<16x32xf32>
      %87 = tpu.matmul %85, %86, %cst_52 {dimension_numbers = #tpu.dot_dimension_numbers<[1], [0], [0], [1], [0, 0, 1, 1], [], []>} : vector<16x64xf32>, vector<64x32xf32>, vector<16x32xf32> -> vector<16x32xf32>
      %c0_53 = arith.constant 0 : index
      %c0_54 = arith.constant 0 : index
      %88 = vector.load %arg4[%c0_53, %c0_54] : memref<1x32xf32, #tpu.memory_space<vmem>>, vector<1x32xf32>
      %89 = vector.broadcast %88 : vector<1x32xf32> to vector<16x32xf32>
      %90 = arith.addf %87, %89 : vector<16x32xf32>
      %c0_55 = arith.constant 0 : index
      %c0_56 = arith.constant 0 : index
      %91 = vector.load %arg18[%c0_55, %c0_56] : memref<16x32xf32, #tpu.memory_space<vmem>>, vector<16x32xf32>
      tpu.vector_store %arg18[%c0_55, %c0_56], %90 {strides = array<i32>} : memref<16x32xf32, #tpu.memory_space<vmem>>, vector<16x32xf32>,
    } else {
    }
    %c0 = arith.constant 0 : index
    %c0_1 = arith.constant 0 : index
    %3 = vector.load %arg18[%c0, %c0_1] : memref<16x32xf32, #tpu.memory_space<vmem>>, vector<16x32xf32>
    %c0_2 = arith.constant 0 : index
    %c0_3 = arith.constant 0 : index
    %c0_4 = arith.constant 0 : index
    %4 = vector.load %arg5[%c0_2, %c0_3, %c0_4] : memref<1x32x32xf32, #tpu.memory_space<vmem>>, vector<1x32x32xf32>
    %5 = vector.shape_cast %4 : vector<1x32x32xf32> to vector<32x32xf32>
    %cst = arith.constant dense<0.000000e+00> : vector<16x32xf32>
    %6 = tpu.matmul %3, %5, %cst {dimension_numbers = #tpu.dot_dimension_numbers<[1], [0], [0], [1], [0, 0, 1, 1], [], []>} : vector<16x32xf32>, vector<32x32xf32>, vector<16x32xf32> -> vector<16x32xf32>
    %c0_5 = arith.constant 0 : index
    %c0_6 = arith.constant 0 : index
    %c0_7 = arith.constant 0 : index
    %7 = vector.load %arg6[%c0_5, %c0_6, %c0_7] : memref<1x1x32xf32, #tpu.memory_space<vmem>>, vector<1x1x32xf32>
    %8 = vector.shape_cast %7 : vector<1x1x32xf32> to vector<1x32xf32>
    %9 = vector.broadcast %8 : vector<1x32xf32> to vector<16x32xf32>
    %10 = arith.addf %6, %9 : vector<16x32xf32>
    %11 = arith.addf %3, %10 : vector<16x32xf32>
    %c0_8 = arith.constant 0 : index
    %c0_9 = arith.constant 0 : index
    %c0_10 = arith.constant 0 : index
    %12 = vector.load %arg7[%c0_8, %c0_9, %c0_10] : memref<1x1x32xf32, #tpu.memory_space<vmem>>, vector<1x1x32xf32>
    %13 = vector.shape_cast %12 : vector<1x1x32xf32> to vector<1x32xf32>
    %c0_11 = arith.constant 0 : index
    %c0_12 = arith.constant 0 : index
    %c0_13 = arith.constant 0 : index
    %14 = vector.load %arg8[%c0_11, %c0_12, %c0_13] : memref<1x1x32xf32, #tpu.memory_space<vmem>>, vector<1x1x32xf32>
    %15 = vector.shape_cast %14 : vector<1x1x32xf32> to vector<1x32xf32>
    %cst_14 = arith.constant dense<0.000000e+00> : vector<16xf32>
    %16 = vector.multi_reduction <add>, %11, %cst_14 [1] : vector<16x32xf32> to vector<16xf32>
    %17 = vector.shape_cast %16 : vector<16xf32> to vector<16x1xf32>
    %cst_15 = arith.constant 3.200000e+01 : f32
    %18 = vector.broadcast %cst_15 : f32 to vector<16x1xf32>
    %19 = arith.divf %17, %18 : vector<16x1xf32>
    %20 = vector.broadcast %19 : vector<16x1xf32> to vector<16x32xf32>
    %21 = arith.subf %11, %20 : vector<16x32xf32>
    %22 = arith.mulf %21, %21 : vector<16x32xf32>
    %cst_16 = arith.constant dense<0.000000e+00> : vector<16xf32>
    %23 = vector.multi_reduction <add>, %22, %cst_16 [1] : vector<16x32xf32> to vector<16xf32>
    %24 = vector.shape_cast %23 : vector<16xf32> to vector<16x1xf32>
    %cst_17 = arith.constant 3.200000e+01 : f32
    %25 = vector.broadcast %cst_17 : f32 to vector<16x1xf32>
    %26 = arith.divf %24, %25 : vector<16x1xf32>
    %27 = vector.broadcast %19 : vector<16x1xf32> to vector<16x32xf32>
    %28 = arith.subf %11, %27 : vector<16x32xf32>
    %cst_18 = arith.constant 9.99999974E-6 : f32
    %29 = vector.broadcast %cst_18 : f32 to vector<16x1xf32>
    %30 = arith.addf %26, %29 : vector<16x1xf32>
    %31 = math.rsqrt %30 : vector<16x1xf32>
    %32 = vector.broadcast %31 : vector<16x1xf32> to vector<16x32xf32>
    %33 = arith.mulf %28, %32 : vector<16x32xf32>
    %34 = vector.broadcast %13 : vector<1x32xf32> to vector<16x32xf32>
    %35 = arith.mulf %33, %34 : vector<16x32xf32>
    %36 = vector.broadcast %15 : vector<1x32xf32> to vector<16x32xf32>
    %37 = arith.addf %35, %36 : vector<16x32xf32>
    %c0_19 = arith.constant 0 : index
    %c0_20 = arith.constant 0 : index
    %c0_21 = arith.constant 0 : index
    %38 = vector.load %arg9[%c0_19, %c0_20, %c0_21] : memref<1x32x32xf32, #tpu.memory_space<vmem>>, vector<1x32x32xf32>
    %39 = vector.shape_cast %38 : vector<1x32x32xf32> to vector<32x32xf32>
    %cst_22 = arith.constant dense<0.000000e+00> : vector<16x32xf32>
    %40 = tpu.matmul %37, %39, %cst_22 {dimension_numbers = #tpu.dot_dimension_numbers<[1], [0], [0], [1], [0, 0, 1, 1], [], []>} : vector<16x32xf32>, vector<32x32xf32>, vector<16x32xf32> -> vector<16x32xf32>
    %c0_23 = arith.constant 0 : index
    %c0_24 = arith.constant 0 : index
    %c0_25 = arith.constant 0 : index
    %41 = vector.load %arg10[%c0_23, %c0_24, %c0_25] : memref<1x1x32xf32, #tpu.memory_space<vmem>>, vector<1x1x32xf32>
    %42 = vector.shape_cast %41 : vector<1x1x32xf32> to vector<1x32xf32>
    %43 = vector.broadcast %42 : vector<1x32xf32> to vector<16x32xf32>
    %44 = arith.addf %40, %43 : vector<16x32xf32>
    %cst_26 = arith.constant 0.000000e+00 : f32
    %45 = vector.broadcast %cst_26 : f32 to vector<16x32xf32>
    %46 = arith.maximumf %44, %45 : vector<16x32xf32>
    %c0_27 = arith.constant 0 : index
    %c0_28 = arith.constant 0 : index
    %c0_29 = arith.constant 0 : index
    %47 = vector.load %arg11[%c0_27, %c0_28, %c0_29] : memref<1x32x32xf32, #tpu.memory_space<vmem>>, vector<1x32x32xf32>
    %48 = vector.shape_cast %47 : vector<1x32x32xf32> to vector<32x32xf32>
    %cst_30 = arith.constant dense<0.000000e+00> : vector<16x32xf32>
    %49 = tpu.matmul %46, %48, %cst_30 {dimension_numbers = #tpu.dot_dimension_numbers<[1], [0], [0], [1], [0, 0, 1, 1], [], []>} : vector<16x32xf32>, vector<32x32xf32>, vector<16x32xf32> -> vector<16x32xf32>
    %c0_31 = arith.constant 0 : index
    %c0_32 = arith.constant 0 : index
    %c0_33 = arith.constant 0 : index
    %50 = vector.load %arg12[%c0_31, %c0_32, %c0_33] : memref<1x1x32xf32, #tpu.memory_space<vmem>>, vector<1x1x32xf32>
    %51 = vector.shape_cast %50 : vector<1x1x32xf32> to vector<1x32xf32>
    %52 = vector.broadcast %51 : vector<1x32xf32> to vector<16x32xf32>
    %53 = arith.addf %49, %52 : vector<16x32xf32>
    %54 = arith.addf %37, %53 : vector<16x32xf32>
    %c0_34 = arith.constant 0 : index
    %c0_35 = arith.constant 0 : index
    %c0_36 = arith.constant 0 : index
    %55 = vector.load %arg13[%c0_34, %c0_35, %c0_36] : memref<1x1x32xf32, #tpu.memory_space<vmem>>, vector<1x1x32xf32>
    %56 = vector.shape_cast %55 : vector<1x1x32xf32> to vector<1x32xf32>
    %c0_37 = arith.constant 0 : index
    %c0_38 = arith.constant 0 : index
    %c0_39 = arith.constant 0 : index
    %57 = vector.load %arg14[%c0_37, %c0_38, %c0_39] : memref<1x1x32xf32, #tpu.memory_space<vmem>>, vector<1x1x32xf32>
    %58 = vector.shape_cast %57 : vector<1x1x32xf32> to vector<1x32xf32>
    %cst_40 = arith.constant dense<0.000000e+00> : vector<16xf32>
    %59 = vector.multi_reduction <add>, %54, %cst_40 [1] : vector<16x32xf32> to vector<16xf32>
    %60 = vector.shape_cast %59 : vector<16xf32> to vector<16x1xf32>
    %cst_41 = arith.constant 3.200000e+01 : f32
    %61 = vector.broadcast %cst_41 : f32 to vector<16x1xf32>
    %62 = arith.divf %60, %61 : vector<16x1xf32>
    %63 = vector.broadcast %62 : vector<16x1xf32> to vector<16x32xf32>
    %64 = arith.subf %54, %63 : vector<16x32xf32>
    %65 = arith.mulf %64, %64 : vector<16x32xf32>
    %cst_42 = arith.constant dense<0.000000e+00> : vector<16xf32>
    %66 = vector.multi_reduction <add>, %65, %cst_42 [1] : vector<16x32xf32> to vector<16xf32>
    %67 = vector.shape_cast %66 : vector<16xf32> to vector<16x1xf32>
    %cst_43 = arith.constant 3.200000e+01 : f32
    %68 = vector.broadcast %cst_43 : f32 to vector<16x1xf32>
    %69 = arith.divf %67, %68 : vector<16x1xf32>
    %70 = vector.broadcast %62 : vector<16x1xf32> to vector<16x32xf32>
    %71 = arith.subf %54, %70 : vector<16x32xf32>
    %cst_44 = arith.constant 9.99999974E-6 : f32
    %72 = vector.broadcast %cst_44 : f32 to vector<16x1xf32>
    %73 = arith.addf %69, %72 : vector<16x1xf32>
    %74 = math.rsqrt %73 : vector<16x1xf32>
    %75 = vector.broadcast %74 : vector<16x1xf32> to vector<16x32xf32>
    %76 = arith.mulf %71, %75 : vector<16x32xf32>
    %77 = vector.broadcast %56 : vector<1x32xf32> to vector<16x32xf32>
    %78 = arith.mulf %76, %77 : vector<16x32xf32>
    %79 = vector.broadcast %58 : vector<1x32xf32> to vector<16x32xf32>
    %80 = arith.addf %78, %79 : vector<16x32xf32>
    %c0_45 = arith.constant 0 : index
    %c0_46 = arith.constant 0 : index
    %81 = vector.load %arg18[%c0_45, %c0_46] : memref<16x32xf32, #tpu.memory_space<vmem>>, vector<16x32xf32>
    tpu.vector_store %arg18[%c0_45, %c0_46], %80 {strides = array<i32>} : memref<16x32xf32, #tpu.memory_space<vmem>>, vector<16x32xf32>,
    %c1_i32 = arith.constant 1 : i32
    %82 = arith.cmpi eq, %arg1, %c1_i32 : i32
    %83 = arith.extui %82 : i1 to i32
    %c0_i32_47 = arith.constant 0 : i32
    %84 = arith.cmpi ne, %83, %c0_i32_47 : i32
    scf.if %84 {
      %c0_48 = arith.constant 0 : index
      %c0_49 = arith.constant 0 : index
      %85 = vector.load %arg15[%c0_48, %c0_49] : memref<32x128xf32, #tpu.memory_space<vmem>>, vector<32x128xf32>
      %cst_50 = arith.constant dense<0.000000e+00> : vector<16x128xf32>
      %86 = tpu.matmul %80, %85, %cst_50 {dimension_numbers = #tpu.dot_dimension_numbers<[1], [0], [0], [1], [0, 0, 1, 1], [], []>} : vector<16x32xf32>, vector<32x128xf32>, vector<16x128xf32> -> vector<16x128xf32>
      %c0_51 = arith.constant 0 : index
      %c0_52 = arith.constant 0 : index
      %87 = vector.load %arg16[%c0_51, %c0_52] : memref<1x128xf32, #tpu.memory_space<vmem>>, vector<1x128xf32>
      %88 = vector.broadcast %87 : vector<1x128xf32> to vector<16x128xf32>
      %89 = arith.addf %86, %88 : vector<16x128xf32>
      %c0_53 = arith.constant 0 : index
      %c0_54 = arith.constant 0 : index
      %90 = vector.load %arg17[%c0_53, %c0_54] : memref<16x128xf32, #tpu.memory_space<vmem>>, vector<16x128xf32>
      tpu.vector_store %arg17[%c0_53, %c0_54], %89 {strides = array<i32>} : memref<16x128xf32, #tpu.memory_space<vmem>>, vector<16x128xf32>,
    } else {
    }
    return
  }
  func.func @transform_0(%arg0: i32, %arg1: i32) -> (i32, i32) {
    %c0_i32 = arith.constant 0 : i32
    %c0_i32_0 = arith.constant 0 : i32
    return %arg0, %c0_i32 : i32, i32
  }
  func.func @transform_1(%arg0: i32, %arg1: i32) -> (i32, i32) {
    %c0_i32 = arith.constant 0 : i32
    %c0_i32_0 = arith.constant 0 : i32
    %c0_i32_1 = arith.constant 0 : i32
    return %c0_i32, %c0_i32_0 : i32, i32
  }
  func.func @transform_2(%arg0: i32, %arg1: i32) -> (i32, i32) {
    %c0_i32 = arith.constant 0 : i32
    %c0_i32_0 = arith.constant 0 : i32
    %c0_i32_1 = arith.constant 0 : i32
    return %c0_i32, %c0_i32_0 : i32, i32
  }
  func.func @transform_3(%arg0: i32, %arg1: i32) -> (i32, i32, i32) {
    %c0_i32 = arith.constant 0 : i32
    %c0_i32_0 = arith.constant 0 : i32
    %c0_i32_1 = arith.constant 0 : i32
    return %arg1, %c0_i32, %c0_i32_0 : i32, i32, i32
  }
  func.func @transform_4(%arg0: i32, %arg1: i32) -> (i32, i32, i32) {
    %c0_i32 = arith.constant 0 : i32
    %c0_i32_0 = arith.constant 0 : i32
    %c0_i32_1 = arith.constant 0 : i32
    return %arg1, %c0_i32, %c0_i32_0 : i32, i32, i32
  }
  func.func @transform_5(%arg0: i32, %arg1: i32) -> (i32, i32, i32) {
    %c0_i32 = arith.constant 0 : i32
    %c0_i32_0 = arith.constant 0 : i32
    %c0_i32_1 = arith.constant 0 : i32
    return %arg1, %c0_i32, %c0_i32_0 : i32, i32, i32
  }
  func.func @transform_6(%arg0: i32, %arg1: i32) -> (i32, i32, i32) {
    %c0_i32 = arith.constant 0 : i32
    %c0_i32_0 = arith.constant 0 : i32
    %c0_i32_1 = arith.constant 0 : i32
    return %arg1, %c0_i32, %c0_i32_0 : i32, i32, i32
  }
  func.func @transform_7(%arg0: i32, %arg1: i32) -> (i32, i32, i32) {
    %c0_i32 = arith.constant 0 : i32
    %c0_i32_0 = arith.constant 0 : i32
    %c0_i32_1 = arith.constant 0 : i32
    return %arg1, %c0_i32, %c0_i32_0 : i32, i32, i32
  }
  func.func @transform_8(%arg0: i32, %arg1: i32) -> (i32, i32, i32) {
    %c0_i32 = arith.constant 0 : i32
    %c0_i32_0 = arith.constant 0 : i32
    %c0_i32_1 = arith.constant 0 : i32
    return %arg1, %c0_i32, %c0_i32_0 : i32, i32, i32
  }
  func.func @transform_9(%arg0: i32, %arg1: i32) -> (i32, i32, i32) {
    %c0_i32 = arith.constant 0 : i32
    %c0_i32_0 = arith.constant 0 : i32
    %c0_i32_1 = arith.constant 0 : i32
    return %arg1, %c0_i32, %c0_i32_0 : i32, i32, i32
  }
  func.func @transform_10(%arg0: i32, %arg1: i32) -> (i32, i32, i32) {
    %c0_i32 = arith.constant 0 : i32
    %c0_i32_0 = arith.constant 0 : i32
    %c0_i32_1 = arith.constant 0 : i32
    return %arg1, %c0_i32, %c0_i32_0 : i32, i32, i32
  }
  func.func @transform_11(%arg0: i32, %arg1: i32) -> (i32, i32, i32) {
    %c0_i32 = arith.constant 0 : i32
    %c0_i32_0 = arith.constant 0 : i32
    %c0_i32_1 = arith.constant 0 : i32
    return %arg1, %c0_i32, %c0_i32_0 : i32, i32, i32
  }
  func.func @transform_12(%arg0: i32, %arg1: i32) -> (i32, i32, i32) {
    %c0_i32 = arith.constant 0 : i32
    %c0_i32_0 = arith.constant 0 : i32
    %c0_i32_1 = arith.constant 0 : i32
    return %arg1, %c0_i32, %c0_i32_0 : i32, i32, i32
  }
  func.func @transform_13(%arg0: i32, %arg1: i32) -> (i32, i32) {
    %c0_i32 = arith.constant 0 : i32
    %c0_i32_0 = arith.constant 0 : i32
    %c0_i32_1 = arith.constant 0 : i32
    return %c0_i32, %c0_i32_0 : i32, i32
  }
  func.func @transform_14(%arg0: i32, %arg1: i32) -> (i32, i32) {
    %c0_i32 = arith.constant 0 : i32
    %c0_i32_0 = arith.constant 0 : i32
    %c0_i32_1 = arith.constant 0 : i32
    return %c0_i32, %c0_i32_0 : i32, i32
  }
  func.func @transform_15(%arg0: i32, %arg1: i32) -> (i32, i32) {
    %c0_i32 = arith.constant 0 : i32
    %c0_i32_0 = arith.constant 0 : i32
    return %arg0, %c0_i32 : i32, i32
  }
}

</mosaic_0001>

<llo_original>
// kernel: tpu_custom_call.1
$region0: #{tpu_custom_call.1}
  #allocation0 [shape = 'u32[]', space=smem, size = 0x4, offset = 0x4, fixed_abs, tag = 'smem constant byte address 0x4 - core index']
  #allocation1 [shape = 'u32[144,128]{1,0:T(1,128)}', space=vmem, size = 0x12000, scoped, tag = 'internal scratch']
  #allocation2 [shape = 'f32[16,32]{1,0:T(8,128)}', space=vmem, size = 0x2000, scoped, tag = 'scratch operand']
  %s0 = inlined_call_operand.hbm [shape: f32[16,64], index: 0, kind: input, shape index: {}]
  %s1 = inlined_call_operand.vmem [shape: f32[64,32], index: 1, kind: input, shape index: {}]
  %s2 = inlined_call_operand.hbm [shape: f32[1,32], index: 2, kind: input, shape index: {}]
  %s3 = inlined_call_operand.vmem [shape: f32[2,32,32], index: 3, kind: input, shape index: {}]
  %s4 = inlined_call_operand.vmem [shape: f32[2,1,32], index: 4, kind: input, shape index: {}]
  %s5 = inlined_call_operand.hbm [shape: f32[2,1,32], index: 5, kind: input, shape index: {}]
  %s6 = inlined_call_operand.hbm [shape: f32[2,1,32], index: 6, kind: input, shape index: {}]
  %s7 = inlined_call_operand.hbm [shape: f32[2,32,32], index: 7, kind: input, shape index: {}]
  %s8 = inlined_call_operand.hbm [shape: f32[2,1,32], index: 8, kind: input, shape index: {}]
  %s9 = inlined_call_operand.vmem [shape: f32[2,32,32], index: 9, kind: input, shape index: {}]
  %s10 = inlined_call_operand.vmem [shape: f32[2,1,32], index: 10, kind: input, shape index: {}]
  %s11 = inlined_call_operand.vmem [shape: f32[2,1,32], index: 11, kind: input, shape index: {}]
  %s12 = inlined_call_operand.vmem [shape: f32[2,1,32], index: 12, kind: input, shape index: {}]
  %s13 = inlined_call_operand.hbm [shape: f32[32,128], index: 13, kind: input, shape index: {}]
  %s14 = inlined_call_operand.vmem [shape: f32[1,128], index: 14, kind: input, shape index: {}]
  %s15 = inlined_call_operand.hbm [shape: f32[16,128], index: 15, kind: output, shape index: {}]
  %s16 = sld [smem:[#allocation0]]
  $region129: #{tpu_custom_call.1} parent=0
    _
  %s18 = ssub.s32 1, %s16
  %s19 = scalar_select 0, %s18, %s16
  $region1: #{tpu_custom_call.1} parent=0
    #allocation3 [shape = 'u8[8192]{0}', space=vmem, size = 0x2000, scoped, tag = 'input window, operand 0, single buffered']
    #allocation4 [shape = 's32[2]{0}', space=sflag, size = 0x8, scoped, tag = 'scoped memory for tpu_custom_call.1']
    #allocation5 [shape = 's32[2]{0}', space=sflag, size = 0x8, scoped, tag = 'scoped memory for tpu_custom_call.1']
    #allocation6 [shape = 'u8[512]{0}', space=vmem, size = 0x400, scoped, tag = 'input window, operand 2, single buffered']
    #allocation7 [shape = 's32[1]{0}', space=sflag, size = 0x4, scoped, tag = 'scoped memory for tpu_custom_call.1']
    #allocation8 [shape = 'u8[1024]{0}', space=vmem, size = 0x400, scoped, tag = 'input window, operand 5']
    #allocation9 [shape = 'u8[1024]{0}', space=vmem, size = 0x400, scoped, tag = 'input window, operand 6']
    #allocation10 [shape = 'u8[32768]{0}', space=vmem, size = 0x8000, scoped, tag = 'input window, operand 7']
    #allocation11 [shape = 'u8[1024]{0}', space=vmem, size = 0x400, scoped, tag = 'input window, operand 8']
    #allocation12 [shape = 'u8[16384]{0}', space=vmem, size = 0x4000, scoped, tag = 'input window, operand 13, single buffered']
    #allocation13 [shape = 'u8[8192]{0}', space=vmem, size = 0x2000, scoped, tag = 'output window, operand 0, single buffered']
    %20 = vsyncpa [#allocation4], 0
    %21 = vsyncpa [#allocation7], 0
    %22 = vsyncpa [#allocation5], 0
    loop: start=0, step=1, limit=4
    $region2: #{tpu_custom_call.1} parent=1 // loop_pre_header
      _
    $region3: #{tpu_custom_call.1} parent=1 // loop_header
      %s24 = sphi 0, %s28
      %p25 = scmp.ge.s32.totalorder %s24, 4
      %s31 = sphi 0, %s43
      %s32 = sphi 0, %s39
      %s33 = sphi 0, %s31
      %s34 = sphi 0, %s32
      %s35 = sphi 0, %s33
      %s36 = sphi 0, %s34
      %s46 = sphi 0, %s48
      %s49 = sphi 0, %s46
      %s50 = sphi 0, %s49
      %s66 = sphi 0, %s50
      %s70 = sphi 0, %s70
      %s72 = sphi 0, %s70
      %s73 = sphi 0, %s72
      %s87 = sphi 0, %s73
      %s91 = sphi 0, %s91
      %s93 = sphi 0, %s91
      %s94 = sphi 0, %s93
      %s108 = sphi 0, %s94
      %s114 = sphi 0, %s116
      %s117 = sphi 0, %s114
      %s118 = sphi 0, %s117
      %s134 = sphi 0, %s118
      %s140 = sphi 0, %s142
      %s143 = sphi 0, %s140
      %s144 = sphi 0, %s143
      %s160 = sphi 0, %s144
      %s166 = sphi 0, %s168
      %s169 = sphi 0, %s166
      %s170 = sphi 0, %s169
      %s186 = sphi 0, %s170
      %s192 = sphi 0, %s194
      %s195 = sphi 0, %s192
      %s196 = sphi 0, %s195
      %s212 = sphi 0, %s196
      %s218 = sphi 0, %s220
      %s221 = sphi 0, %s218
      %s222 = sphi 0, %s221
      %s238 = sphi 0, %s222
      %s244 = sphi 0, %s246
      %s247 = sphi 0, %s244
      %s248 = sphi 0, %s247
      %s264 = sphi 0, %s248
      %s270 = sphi 0, %s272
      %s273 = sphi 0, %s270
      %s274 = sphi 0, %s273
      %s290 = sphi 0, %s274
      %s296 = sphi 0, %s298
      %s299 = sphi 0, %s296
      %s300 = sphi 0, %s299
      %s316 = sphi 0, %s300
      %s322 = sphi 0, %s324
      %s325 = sphi 0, %s322
      %s326 = sphi 0, %s325
      %s342 = sphi 0, %s326
      %s348 = sphi 0, %s350
      %s351 = sphi 0, %s348
      %s352 = sphi 0, %s351
      %s368 = sphi 0, %s352
      %s372 = sphi 0, %s372
      %s374 = sphi 0, %s372
      %s375 = sphi 0, %s374
      %s389 = sphi 0, %s375
      %s393 = sphi 0, %s393
      %s395 = sphi 0, %s393
      %s396 = sphi 0, %s395
      %s410 = sphi 0, %s396
      %s416 = sphi 0, %s418
      %s419 = sphi 0, %s416
      %s420 = sphi 0, %s419
      %s436 = sphi 0, %s420
    $region4: #{tpu_custom_call.1} parent=1 // loop_header_branch
      %27 = sbr.rel (%p25) target = $region8
    $region5: #{tpu_custom_call.1} parent=1 // loop_body
      %s29 = ssub.s32 %s24, 1
      %s30 = ssub.s32 %s24, 2
      %s37 = sadd.s32 1, %s32
      %p38 = scmp.ge.s32.totalorder %s37, 2
      %s39 = scalar_select %p38, 0, %s37
      %s40 = sadd.s32 1, %s31
      %s41 = scalar_select %p38, %s40, %s31
      %p42 = scmp.ge.s32.totalorder %s41, 1
      %s43 = scalar_select %p42, 0, %s41
      %s44 = ssub.s32 %s31, %s43
      %p45 = scmp.eq.s32.totalorder %s44, 0
      %s47 = sadd.s32 %s46, 1
      %s48 = scalar_select %p45, %s46, %s47
      %p51 = pneg %p45
      %p52 = scmp.eq.s32.totalorder %s24, 1
      %p53 = por %p51, %p52
      %p54 = scmp.ne.s32.totalorder %s46, %s49
      %p55 = scmp.eq.s32.totalorder %s24, 0
      %p56 = por %p54, %p55
      %p57 = scmp.ne.s32.totalorder %s46, %s49
      %p58 = scmp.eq.s32.totalorder %s29, 1
      %p59 = por %p57, %p58
      %p60 = scmp.ne.s32.totalorder %s49, %s50
      %p61 = scmp.eq.s32.totalorder %s29, 0
      %p62 = por %p60, %p61
      %p63 = scmp.ne.s32.totalorder %s49, %s50
      %p64 = scmp.eq.s32.totalorder %s30, 1
      %p65 = por %p63, %p64
      %p67 = scmp.ne.s32.totalorder %s50, %s66
      %p68 = scmp.eq.s32.totalorder %s30, 0
      %p69 = por %p67, %p68
      %s71 = sadd.s32 %s70, 1
      %p74 = scmp.eq.s32.totalorder %s24, 1
      %p75 = scmp.ne.s32.totalorder %s70, %s72
      %p76 = scmp.eq.s32.totalorder %s24, 0
      %p77 = por %p75, %p76
      %p78 = scmp.ne.s32.totalorder %s70, %s72
      %p79 = scmp.eq.s32.totalorder %s29, 1
      %p80 = por %p78, %p79
      %p81 = scmp.ne.s32.totalorder %s72, %s73
      %p82 = scmp.eq.s32.totalorder %s29, 0
      %p83 = por %p81, %p82
      %p84 = scmp.ne.s32.totalorder %s72, %s73
      %p85 = scmp.eq.s32.totalorder %s30, 1
      %p86 = por %p84, %p85
      %p88 = scmp.ne.s32.totalorder %s73, %s87
      %p89 = scmp.eq.s32.totalorder %s30, 0
      %p90 = por %p88, %p89
      %s92 = sadd.s32 %s91, 1
      %p95 = scmp.eq.s32.totalorder %s24, 1
      %p96 = scmp.ne.s32.totalorder %s91, %s93
      %p97 = scmp.eq.s32.totalorder %s24, 0
      %p98 = por %p96, %p97
      %p99 = scmp.ne.s32.totalorder %s91, %s93
      %p100 = scmp.eq.s32.totalorder %s29, 1
      %p101 = por %p99, %p100
      %p102 = scmp.ne.s32.totalorder %s93, %s94
      %p103 = scmp.eq.s32.totalorder %s29, 0
      %p104 = por %p102, %p103
      %p105 = scmp.ne.s32.totalorder %s93, %s94
      %p106 = scmp.eq.s32.totalorder %s30, 1
      %p107 = por %p105, %p106
      %p109 = scmp.ne.s32.totalorder %s94, %s108
      %p110 = scmp.eq.s32.totalorder %s30, 0
      %p111 = por %p109, %p110
      %s112 = ssub.s32 %s32, %s39
      %p113 = scmp.eq.s32.totalorder %s112, 0
      %s115 = sadd.s32 %s114, 1
      %s116 = scalar_select %p113, %s114, %s115
      %p119 = pneg %p113
      %p120 = scmp.eq.s32.totalorder %s24, 1
      %p121 = por %p119, %p120
      %p122 = scmp.ne.s32.totalorder %s114, %s117
      %p123 = scmp.eq.s32.totalorder %s24, 0
      %p124 = por %p122, %p123
      %p125 = scmp.ne.s32.totalorder %s114, %s117
      %p126 = scmp.eq.s32.totalorder %s29, 1
      %p127 = por %p125, %p126
      %p128 = scmp.ne.s32.totalorder %s117, %s118
      %p129 = scmp.eq.s32.totalorder %s29, 0
      %p130 = por %p128, %p129
      %p131 = scmp.ne.s32.totalorder %s117, %s118
      %p132 = scmp.eq.s32.totalorder %s30, 1
      %p133 = por %p131, %p132
      %p135 = scmp.ne.s32.totalorder %s118, %s134
      %p136 = scmp.eq.s32.totalorder %s30, 0
      %p137 = por %p135, %p136
      %s138 = ssub.s32 %s32, %s39
      %p139 = scmp.eq.s32.totalorder %s138, 0
      %s141 = sadd.s32 %s140, 1
      %s142 = scalar_select %p139, %s140, %s141
      %p145 = pneg %p139
      %p146 = scmp.eq.s32.totalorder %s24, 1
      %p147 = por %p145, %p146
      %p148 = scmp.ne.s32.totalorder %s140, %s143
      %p149 = scmp.eq.s32.totalorder %s24, 0
      %p150 = por %p148, %p149
      %p151 = scmp.ne.s32.totalorder %s140, %s143
      %p152 = scmp.eq.s32.totalorder %s29, 1
      %p153 = por %p151, %p152
      %p154 = scmp.ne.s32.totalorder %s143, %s144
      %p155 = scmp.eq.s32.totalorder %s29, 0
      %p156 = por %p154, %p155
      %p157 = scmp.ne.s32.totalorder %s143, %s144
      %p158 = scmp.eq.s32.totalorder %s30, 1
      %p159 = por %p157, %p158
      %p161 = scmp.ne.s32.totalorder %s144, %s160
      %p162 = scmp.eq.s32.totalorder %s30, 0
      %p163 = por %p161, %p162
      %s164 = ssub.s32 %s32, %s39
      %p165 = scmp.eq.s32.totalorder %s164, 0
      %s167 = sadd.s32 %s166, 1
      %s168 = scalar_select %p165, %s166, %s167
      %p171 = pneg %p165
      %p172 = scmp.eq.s32.totalorder %s24, 1
      %p173 = por %p171, %p172
      %p174 = scmp.ne.s32.totalorder %s166, %s169
      %p175 = scmp.eq.s32.totalorder %s24, 0
      %p176 = por %p174, %p175
      %p177 = scmp.ne.s32.totalorder %s166, %s169
      %p178 = scmp.eq.s32.totalorder %s29, 1
      %p179 = por %p177, %p178
      %p180 = scmp.ne.s32.totalorder %s169, %s170
      %p181 = scmp.eq.s32.totalorder %s29, 0
      %p182 = por %p180, %p181
      %p183 = scmp.ne.s32.totalorder %s169, %s170
      %p184 = scmp.eq.s32.totalorder %s30, 1
      %p185 = por %p183, %p184
      %p187 = scmp.ne.s32.totalorder %s170, %s186
      %p188 = scmp.eq.s32.totalorder %s30, 0
      %p189 = por %p187, %p188
      %s190 = ssub.s32 %s32, %s39
      %p191 = scmp.eq.s32.totalorder %s190, 0
      %s193 = sadd.s32 %s192, 1
      %s194 = scalar_select %p191, %s192, %s193
      %p197 = pneg %p191
      %p198 = scmp.eq.s32.totalorder %s24, 1
      %p199 = por %p197, %p198
      %p200 = scmp.ne.s32.totalorder %s192, %s195
      %p201 = scmp.eq.s32.totalorder %s24, 0
      %p202 = por %p200, %p201
      %p203 = scmp.ne.s32.totalorder %s192, %s195
      %p204 = scmp.eq.s32.totalorder %s29, 1
      %p205 = por %p203, %p204
      %p206 = scmp.ne.s32.totalorder %s195, %s196
      %p207 = scmp.eq.s32.totalorder %s29, 0
      %p208 = por %p206, %p207
      %p209 = scmp.ne.s32.totalorder %s195, %s196
      %p210 = scmp.eq.s32.totalorder %s30, 1
      %p211 = por %p209, %p210
      %p213 = scmp.ne.s32.totalorder %s196, %s212
      %p214 = scmp.eq.s32.totalorder %s30, 0
      %p215 = por %p213, %p214
      %s216 = ssub.s32 %s32, %s39
      %p217 = scmp.eq.s32.totalorder %s216, 0
      %s219 = sadd.s32 %s218, 1
      %s220 = scalar_select %p217, %s218, %s219
      %p223 = pneg %p217
      %p224 = scmp.eq.s32.totalorder %s24, 1
      %p225 = por %p223, %p224
      %p226 = scmp.ne.s32.totalorder %s218, %s221
      %p227 = scmp.eq.s32.totalorder %s24, 0
      %p228 = por %p226, %p227
      %p229 = scmp.ne.s32.totalorder %s218, %s221
      %p230 = scmp.eq.s32.totalorder %s29, 1
      %p231 = por %p229, %p230
      %p232 = scmp.ne.s32.totalorder %s221, %s222
      %p233 = scmp.eq.s32.totalorder %s29, 0
      %p234 = por %p232, %p233
      %p235 = scmp.ne.s32.totalorder %s221, %s222
      %p236 = scmp.eq.s32.totalorder %s30, 1
      %p237 = por %p235, %p236
      %p239 = scmp.ne.s32.totalorder %s222, %s238
      %p240 = scmp.eq.s32.totalorder %s30, 0
      %p241 = por %p239, %p240
      %s242 = ssub.s32 %s32, %s39
      %p243 = scmp.eq.s32.totalorder %s242, 0
      %s245 = sadd.s32 %s244, 1
      %s246 = scalar_select %p243, %s244, %s245
      %p249 = pneg %p243
      %p250 = scmp.eq.s32.totalorder %s24, 1
      %p251 = por %p249, %p250
      %p252 = scmp.ne.s32.totalorder %s244, %s247
      %p253 = scmp.eq.s32.totalorder %s24, 0
      %p254 = por %p252, %p253
      %p255 = scmp.ne.s32.totalorder %s244, %s247
      %p256 = scmp.eq.s32.totalorder %s29, 1
      %p257 = por %p255, %p256
      %p258 = scmp.ne.s32.totalorder %s247, %s248
      %p259 = scmp.eq.s32.totalorder %s29, 0
      %p260 = por %p258, %p259
      %p261 = scmp.ne.s32.totalorder %s247, %s248
      %p262 = scmp.eq.s32.totalorder %s30, 1
      %p263 = por %p261, %p262
      %p265 = scmp.ne.s32.totalorder %s248, %s264
      %p266 = scmp.eq.s32.totalorder %s30, 0
      %p267 = por %p265, %p266
      %s268 = ssub.s32 %s32, %s39
      %p269 = scmp.eq.s32.totalorder %s268, 0
      %s271 = sadd.s32 %s270, 1
      %s272 = scalar_select %p269, %s270, %s271
      %p275 = pneg %p269
      %p276 = scmp.eq.s32.totalorder %s24, 1
      %p277 = por %p275, %p276
      %p278 = scmp.ne.s32.totalorder %s270, %s273
      %p279 = scmp.eq.s32.totalorder %s24, 0
      %p280 = por %p278, %p279
      %p281 = scmp.ne.s32.totalorder %s270, %s273
      %p282 = scmp.eq.s32.totalorder %s29, 1
      %p283 = por %p281, %p282
      %p284 = scmp.ne.s32.totalorder %s273, %s274
      %p285 = scmp.eq.s32.totalorder %s29, 0
      %p286 = por %p284, %p285
      %p287 = scmp.ne.s32.totalorder %s273, %s274
      %p288 = scmp.eq.s32.totalorder %s30, 1
      %p289 = por %p287, %p288
      %p291 = scmp.ne.s32.totalorder %s274, %s290
      %p292 = scmp.eq.s32.totalorder %s30, 0
      %p293 = por %p291, %p292
      %s294 = ssub.s32 %s32, %s39
      %p295 = scmp.eq.s32.totalorder %s294, 0
      %s297 = sadd.s32 %s296, 1
      %s298 = scalar_select %p295, %s296, %s297
      %p301 = pneg %p295
      %p302 = scmp.eq.s32.totalorder %s24, 1
      %p303 = por %p301, %p302
      %p304 = scmp.ne.s32.totalorder %s296, %s299
      %p305 = scmp.eq.s32.totalorder %s24, 0
      %p306 = por %p304, %p305
      %p307 = scmp.ne.s32.totalorder %s296, %s299
      %p308 = scmp.eq.s32.totalorder %s29, 1
      %p309 = por %p307, %p308
      %p310 = scmp.ne.s32.totalorder %s299, %s300
      %p311 = scmp.eq.s32.totalorder %s29, 0
      %p312 = por %p310, %p311
      %p313 = scmp.ne.s32.totalorder %s299, %s300
      %p314 = scmp.eq.s32.totalorder %s30, 1
      %p315 = por %p313, %p314
      %p317 = scmp.ne.s32.totalorder %s300, %s316
      %p318 = scmp.eq.s32.totalorder %s30, 0
      %p319 = por %p317, %p318
      %s320 = ssub.s32 %s32, %s39
      %p321 = scmp.eq.s32.totalorder %s320, 0
      %s323 = sadd.s32 %s322, 1
      %s324 = scalar_select %p321, %s322, %s323
      %p327 = pneg %p321
      %p328 = scmp.eq.s32.totalorder %s24, 1
      %p329 = por %p327, %p328
      %p330 = scmp.ne.s32.totalorder %s322, %s325
      %p331 = scmp.eq.s32.totalorder %s24, 0
      %p332 = por %p330, %p331
      %p333 = scmp.ne.s32.totalorder %s322, %s325
      %p334 = scmp.eq.s32.totalorder %s29, 1
      %p335 = por %p333, %p334
      %p336 = scmp.ne.s32.totalorder %s325, %s326
      %p337 = scmp.eq.s32.totalorder %s29, 0
      %p338 = por %p336, %p337
      %p339 = scmp.ne.s32.totalorder %s325, %s326
      %p340 = scmp.eq.s32.totalorder %s30, 1
      %p341 = por %p339, %p340
      %p343 = scmp.ne.s32.totalorder %s326, %s342
      %p344 = scmp.eq.s32.totalorder %s30, 0
      %p345 = por %p343, %p344
      %s346 = ssub.s32 %s32, %s39
      %p347 = scmp.eq.s32.totalorder %s346, 0
      %s349 = sadd.s32 %s348, 1
      %s350 = scalar_select %p347, %s348, %s349
      %p353 = pneg %p347
      %p354 = scmp.eq.s32.totalorder %s24, 1
      %p355 = por %p353, %p354
      %p356 = scmp.ne.s32.totalorder %s348, %s351
      %p357 = scmp.eq.s32.totalorder %s24, 0
      %p358 = por %p356, %p357
      %p359 = scmp.ne.s32.totalorder %s348, %s351
      %p360 = scmp.eq.s32.totalorder %s29, 1
      %p361 = por %p359, %p360
      %p362 = scmp.ne.s32.totalorder %s351, %s352
      %p363 = scmp.eq.s32.totalorder %s29, 0
      %p364 = por %p362, %p363
      %p365 = scmp.ne.s32.totalorder %s351, %s352
      %p366 = scmp.eq.s32.totalorder %s30, 1
      %p367 = por %p365, %p366
      %p369 = scmp.ne.s32.totalorder %s352, %s368
      %p370 = scmp.eq.s32.totalorder %s30, 0
      %p371 = por %p369, %p370
      %s373 = sadd.s32 %s372, 1
      %p376 = scmp.eq.s32.totalorder %s24, 1
      %p377 = scmp.ne.s32.totalorder %s372, %s374
      %p378 = scmp.eq.s32.totalorder %s24, 0
      %p379 = por %p377, %p378
      %p380 = scmp.ne.s32.totalorder %s372, %s374
      %p381 = scmp.eq.s32.totalorder %s29, 1
      %p382 = por %p380, %p381
      %p383 = scmp.ne.s32.totalorder %s374, %s375
      %p384 = scmp.eq.s32.totalorder %s29, 0
      %p385 = por %p383, %p384
      %p386 = scmp.ne.s32.totalorder %s374, %s375
      %p387 = scmp.eq.s32.totalorder %s30, 1
      %p388 = por %p386, %p387
      %p390 = scmp.ne.s32.totalorder %s375, %s389
      %p391 = scmp.eq.s32.totalorder %s30, 0
      %p392 = por %p390, %p391
      %s394 = sadd.s32 %s393, 1
      %p397 = scmp.eq.s32.totalorder %s24, 1
      %p398 = scmp.ne.s32.totalorder %s393, %s395
      %p399 = scmp.eq.s32.totalorder %s24, 0
      %p400 = por %p398, %p399
      %p401 = scmp.ne.s32.totalorder %s393, %s395
      %p402 = scmp.eq.s32.totalorder %s29, 1
      %p403 = por %p401, %p402
      %p404 = scmp.ne.s32.totalorder %s395, %s396
      %p405 = scmp.eq.s32.totalorder %s29, 0
      %p406 = por %p404, %p405
      %p407 = scmp.ne.s32.totalorder %s395, %s396
      %p408 = scmp.eq.s32.totalorder %s30, 1
      %p409 = por %p407, %p408
      %p411 = scmp.ne.s32.totalorder %s396, %s410
      %p412 = scmp.eq.s32.totalorder %s30, 0
      %p413 = por %p411, %p412
      %s414 = ssub.s32 %s31, %s43
      %p415 = scmp.eq.s32.totalorder %s414, 0
      %s417 = sadd.s32 %s416, 1
      %s418 = scalar_select %p415, %s416, %s417
      %p421 = pneg %p415
      %p422 = scmp.eq.s32.totalorder %s24, 1
      %p423 = por %p421, %p422
      %p424 = scmp.ne.s32.totalorder %s416, %s419
      %p425 = scmp.eq.s32.totalorder %s24, 0
      %p426 = por %p424, %p425
      %p427 = scmp.ne.s32.totalorder %s416, %s419
      %p428 = scmp.eq.s32.totalorder %s29, 1
      %p429 = por %p427, %p428
      %p430 = scmp.ne.s32.totalorder %s419, %s420
      %p431 = scmp.eq.s32.totalorder %s29, 0
      %p432 = por %p430, %p431
      %p433 = scmp.ne.s32.totalorder %s419, %s420
      %p434 = scmp.eq.s32.totalorder %s30, 1
      %p435 = por %p433, %p434
      %p437 = scmp.ne.s32.totalorder %s420, %s436
      %p438 = scmp.eq.s32.totalorder %s30, 0
      %p439 = por %p437, %p438
      %p440 = scmp.le.s32.totalorder 1, %s24
      %p441 = scmp.lt.s32.totalorder %s24, 3
      %p442 = pnand %p440, %p441
      %p443 = pneg %p442
      // Predicated region
      $region9: #{tpu_custom_call.1} parent=5 // pred_check
        _
      $region10: #{tpu_custom_call.1} parent=5 // pred_check_branch
        %445 = sbr.rel (%p442) target = $region12
      $region11: #{tpu_custom_call.1} parent=5 // pred_region
        %s446 = ssub.s32 %s24, 1
        // Predicated region
        $region13: #{tpu_custom_call.1} parent=11 // pred_check
          %p447 = pneg %p62
        $region14: #{tpu_custom_call.1} parent=11 // pred_check_branch
          %449 = sbr.rel (%p447) target = $region16
        $region15: #{tpu_custom_call.1} parent=11 // pred_region
          %s450 = smul.u32 2, %s33
          %s452 = ssub.s32 256, 256
          %453 = vsyncadd [#allocation4], %s452
          %s454 = smul.addr %s450, 128
          %s455 = scalar_lea.hbm %s0, %s454
          %s456 = sshll.u32 [#allocation3], 4
          %s457 = int_to_ptr.vmem [resolvable:$true] %s456
          %462 = dma.hbm_to_vmem [thread:$0]  %s455, 256, %s457, [#allocation4], 128, 128, 8
        $region16: #{tpu_custom_call.1} parent=11 // pred_fallthru
          _
        // Predicated region
        $region17: #{tpu_custom_call.1} parent=11 // pred_check
          %p463 = pneg %p83
        $region18: #{tpu_custom_call.1} parent=11 // pred_check_branch
          %465 = sbr.rel (%p463) target = $region20
        $region19: #{tpu_custom_call.1} parent=11 // pred_region
          _
        $region20: #{tpu_custom_call.1} parent=11 // pred_fallthru
          _
        // Predicated region
        $region21: #{tpu_custom_call.1} parent=11 // pred_check
          %p466 = pneg %p104
        $region22: #{tpu_custom_call.1} parent=11 // pred_check_branch
          %468 = sbr.rel (%p466) target = $region24
        $region23: #{tpu_custom_call.1} parent=11 // pred_region
          %s470 = ssub.s32 16, 16
          %471 = vsyncadd [#allocation7], %s470
          %s473 = sshll.u32 [#allocation6], 4
          %s474 = int_to_ptr.vmem [resolvable:$true] %s473
          %476 = dma.hbm_to_vmem [thread:$0]  %s2, 16, %s474, [#allocation7]
        $region24: #{tpu_custom_call.1} parent=11 // pred_fallthru
          _
        // Predicated region
        $region25: #{tpu_custom_call.1} parent=11 // pred_check
          %p477 = pneg %p385
        $region26: #{tpu_custom_call.1} parent=11 // pred_check_branch
          %479 = sbr.rel (%p477) target = $region28
        $region27: #{tpu_custom_call.1} parent=11 // pred_region
          %s481 = ssub.s32 512, 512
          %482 = vsyncadd [#allocation7], %s481
          %s483 = sshll.u32 [#allocation12], 4
          %s484 = int_to_ptr.vmem [resolvable:$true] %s483
          %489 = dma.hbm_to_vmem [thread:$0]  %s13, 512, %s484, [#allocation7], 128, 128, 8
        $region28: #{tpu_custom_call.1} parent=11 // pred_fallthru
          _
        // Predicated region
        $region29: #{tpu_custom_call.1} parent=11 // pred_check
          %p490 = pneg %p406
        $region30: #{tpu_custom_call.1} parent=11 // pred_check_branch
          %492 = sbr.rel (%p490) target = $region32
        $region31: #{tpu_custom_call.1} parent=11 // pred_region
          _
        $region32: #{tpu_custom_call.1} parent=11 // pred_fallthru
          _
      $region12: #{tpu_custom_call.1} parent=5 // pred_fallthru
        _
      %p493 = scmp.lt.s32.totalorder %s24, 2
      // Predicated region
      $region33: #{tpu_custom_call.1} parent=5 // pred_check
        %p494 = pneg %p493
      $region34: #{tpu_custom_call.1} parent=5 // pred_check_branch
        %496 = sbr.rel (%p494) target = $region36
      $region35: #{tpu_custom_call.1} parent=5 // pred_region
        // Predicated region
        $region37: #{tpu_custom_call.1} parent=35 // pred_check
          %p497 = pneg %p124
        $region38: #{tpu_custom_call.1} parent=35 // pred_check_branch
          %499 = sbr.rel (%p497) target = $region40
        $region39: #{tpu_custom_call.1} parent=35 // pred_region
          %p500 = scmp.lt.s32.totalorder %s32, 1
          %s501 = scalar_select %p500, %s32, 1
          %s502 = smul.addr %s501, 4
          %s503 = smul.addr %s502, 8
          %s504 = scalar_lea.vmem %s3, %s503
        $region40: #{tpu_custom_call.1} parent=35 // pred_fallthru
          _
        // Predicated region
        $region41: #{tpu_custom_call.1} parent=35 // pred_check
          %p505 = pneg %p150
        $region42: #{tpu_custom_call.1} parent=35 // pred_check_branch
          %507 = sbr.rel (%p505) target = $region44
        $region43: #{tpu_custom_call.1} parent=35 // pred_region
          %p508 = scmp.lt.s32.totalorder %s32, 1
          %s509 = scalar_select %p508, %s32, 1
          %s510 = scalar_lea.vmem %s4, %s509
        $region44: #{tpu_custom_call.1} parent=35 // pred_fallthru
          _
        // Predicated region
        $region45: #{tpu_custom_call.1} parent=35 // pred_check
          %p511 = pneg %p176
        $region46: #{tpu_custom_call.1} parent=35 // pred_check_branch
          %513 = sbr.rel (%p511) target = $region48
        $region47: #{tpu_custom_call.1} parent=35 // pred_region
          %s514 = sand.u32 %s24, 1
          %s515 = scalar_lea.sflag [#allocation4], %s514
          %s516 = sand.u32 %s166, 1
          %s517 = scalar_lea.vmem [#allocation8], %s516
          %s519 = ssub.s32 16, 16
          %520 = vsyncadd %s515, %s519
          %s521 = smul.addr %s32, 16
          %s522 = scalar_lea.hbm %s5, %s521
          %s524 = sshll.u32 %s517, 4
          %s525 = int_to_ptr.vmem [resolvable:$true] %s524
          %527 = dma.hbm_to_vmem [thread:$0]  %s522, 16, %s525, %s515
        $region48: #{tpu_custom_call.1} parent=35 // pred_fallthru
          _
        // Predicated region
        $region49: #{tpu_custom_call.1} parent=35 // pred_check
          %p528 = pneg %p202
        $region50: #{tpu_custom_call.1} parent=35 // pred_check_branch
          %530 = sbr.rel (%p528) target = $region52
        $region51: #{tpu_custom_call.1} parent=35 // pred_region
          %s531 = sand.u32 %s24, 1
          %s532 = scalar_lea.sflag [#allocation4], %s531
          %s533 = sand.u32 %s192, 1
          %s534 = scalar_lea.vmem [#allocation9], %s533
          %s536 = ssub.s32 16, 16
          %537 = vsyncadd %s532, %s536
          %s538 = smul.addr %s32, 16
          %s539 = scalar_lea.hbm %s6, %s538
          %s541 = sshll.u32 %s534, 4
          %s542 = int_to_ptr.vmem [resolvable:$true] %s541
          %544 = dma.hbm_to_vmem [thread:$0]  %s539, 16, %s542, %s532
        $region52: #{tpu_custom_call.1} parent=35 // pred_fallthru
          _
        // Predicated region
        $region53: #{tpu_custom_call.1} parent=35 // pred_check
          %p545 = pneg %p228
        $region54: #{tpu_custom_call.1} parent=35 // pred_check_branch
          %547 = sbr.rel (%p545) target = $region56
        $region55: #{tpu_custom_call.1} parent=35 // pred_region
          %s548 = sand.u32 %s24, 1
          %s549 = scalar_lea.sflag [#allocation4], %s548
          %s550 = sand.u32 %s218, 1
          %s551 = smul.addr %s550, 32
          %s552 = scalar_lea.vmem [#allocation10], %s551
          %s554 = ssub.s32 512, 512
          %555 = vsyncadd %s549, %s554
          %s556 = smul.addr %s32, 4
          %s557 = smul.addr %s556, 128
          %s558 = scalar_lea.hbm %s7, %s557
          %s559 = sshll.u32 %s552, 4
          %s560 = int_to_ptr.vmem [resolvable:$true] %s559
          %565 = dma.hbm_to_vmem [thread:$0]  %s558, 512, %s560, %s549, 128, 128, 8
        $region56: #{tpu_custom_call.1} parent=35 // pred_fallthru
          _
        // Predicated region
        $region57: #{tpu_custom_call.1} parent=35 // pred_check
          %p566 = pneg %p254
        $region58: #{tpu_custom_call.1} parent=35 // pred_check_branch
          %568 = sbr.rel (%p566) target = $region60
        $region59: #{tpu_custom_call.1} parent=35 // pred_region
          %s569 = sand.u32 %s24, 1
          %s570 = scalar_lea.sflag [#allocation4], %s569
          %s571 = sand.u32 %s244, 1
          %s572 = scalar_lea.vmem [#allocation11], %s571
          %s574 = ssub.s32 16, 16
          %575 = vsyncadd %s570, %s574
          %s576 = smul.addr %s32, 16
          %s577 = scalar_lea.hbm %s8, %s576
          %s579 = sshll.u32 %s572, 4
          %s580 = int_to_ptr.vmem [resolvable:$true] %s579
          %582 = dma.hbm_to_vmem [thread:$0]  %s577, 16, %s580, %s570
        $region60: #{tpu_custom_call.1} parent=35 // pred_fallthru
          _
        // Predicated region
        $region61: #{tpu_custom_call.1} parent=35 // pred_check
          %p583 = pneg %p280
        $region62: #{tpu_custom_call.1} parent=35 // pred_check_branch
          %585 = sbr.rel (%p583) target = $region64
        $region63: #{tpu_custom_call.1} parent=35 // pred_region
          %p586 = scmp.lt.s32.totalorder %s32, 1
          %s587 = scalar_select %p586, %s32, 1
          %s588 = smul.addr %s587, 4
          %s589 = smul.addr %s588, 8
          %s590 = scalar_lea.vmem %s9, %s589
        $region64: #{tpu_custom_call.1} parent=35 // pred_fallthru
          _
        // Predicated region
        $region65: #{tpu_custom_call.1} parent=35 // pred_check
          %p591 = pneg %p306
        $region66: #{tpu_custom_call.1} parent=35 // pred_check_branch
          %593 = sbr.rel (%p591) target = $region68
        $region67: #{tpu_custom_call.1} parent=35 // pred_region
          %p594 = scmp.lt.s32.totalorder %s32, 1
          %s595 = scalar_select %p594, %s32, 1
          %s596 = scalar_lea.vmem %s10, %s595
        $region68: #{tpu_custom_call.1} parent=35 // pred_fallthru
          _
        // Predicated region
        $region69: #{tpu_custom_call.1} parent=35 // pred_check
          %p597 = pneg %p332
        $region70: #{tpu_custom_call.1} parent=35 // pred_check_branch
          %599 = sbr.rel (%p597) target = $region72
        $region71: #{tpu_custom_call.1} parent=35 // pred_region
          %p600 = scmp.lt.s32.totalorder %s32, 1
          %s601 = scalar_select %p600, %s32, 1
          %s602 = scalar_lea.vmem %s11, %s601
        $region72: #{tpu_custom_call.1} parent=35 // pred_fallthru
          _
        // Predicated region
        $region73: #{tpu_custom_call.1} parent=35 // pred_check
          %p603 = pneg %p358
        $region74: #{tpu_custom_call.1} parent=35 // pred_check_branch
          %605 = sbr.rel (%p603) target = $region76
        $region75: #{tpu_custom_call.1} parent=35 // pred_region
          %p606 = scmp.lt.s32.totalorder %s32, 1
          %s607 = scalar_select %p606, %s32, 1
          %s608 = scalar_lea.vmem %s12, %s607
        $region76: #{tpu_custom_call.1} parent=35 // pred_fallthru
          _
      $region36: #{tpu_custom_call.1} parent=5 // pred_fallthru
        _
      %p609 = scmp.le.s32.totalorder 1, %s24
      %p610 = scmp.lt.s32.totalorder %s24, 3
      %p611 = pnand %p609, %p610
      %p612 = pneg %p611
      // Predicated region
      $region77: #{tpu_custom_call.1} parent=5 // pred_check
        _
      $region78: #{tpu_custom_call.1} parent=5 // pred_check_branch
        %614 = sbr.rel (%p611) target = $region80
      $region79: #{tpu_custom_call.1} parent=5 // pred_region
        %s615 = ssub.s32 %s24, 1
        // Predicated region
        $region81: #{tpu_custom_call.1} parent=79 // pred_check
          %p616 = pneg %p62
        $region82: #{tpu_custom_call.1} parent=79 // pred_check_branch
          %618 = sbr.rel (%p616) target = $region84
        $region83: #{tpu_custom_call.1} parent=79 // pred_region
          %619 = dma.done [#allocation4], 256
        $region84: #{tpu_custom_call.1} parent=79 // pred_fallthru
          _
        // Predicated region
        $region85: #{tpu_custom_call.1} parent=79 // pred_check
          %p620 = pneg %p104
        $region86: #{tpu_custom_call.1} parent=79 // pred_check_branch
          %622 = sbr.rel (%p620) target = $region88
        $region87: #{tpu_custom_call.1} parent=79 // pred_region
          %623 = dma.done [#allocation7], 16
        $region88: #{tpu_custom_call.1} parent=79 // pred_fallthru
          _
        %s624 = sand.u32 %s29, 1
        %s625 = scalar_lea.sflag [#allocation4], %s624
        %s626 = sand.u32 %s169, 1
        %s627 = scalar_lea.vmem [#allocation8], %s626
        // Predicated region
        $region89: #{tpu_custom_call.1} parent=79 // pred_check
          %p628 = pneg %p182
        $region90: #{tpu_custom_call.1} parent=79 // pred_check_branch
          %630 = sbr.rel (%p628) target = $region92
        $region91: #{tpu_custom_call.1} parent=79 // pred_region
          %631 = dma.done %s625, 16
        $region92: #{tpu_custom_call.1} parent=79 // pred_fallthru
          _
        %s632 = sand.u32 %s29, 1
        %s633 = scalar_lea.sflag [#allocation4], %s632
        %s634 = sand.u32 %s195, 1
        %s635 = scalar_lea.vmem [#allocation9], %s634
        // Predicated region
        $region93: #{tpu_custom_call.1} parent=79 // pred_check
          %p636 = pneg %p208
        $region94: #{tpu_custom_call.1} parent=79 // pred_check_branch
          %638 = sbr.rel (%p636) target = $region96
        $region95: #{tpu_custom_call.1} parent=79 // pred_region
          %639 = dma.done %s633, 16
        $region96: #{tpu_custom_call.1} parent=79 // pred_fallthru
          _
        %s640 = sand.u32 %s29, 1
        %s641 = scalar_lea.sflag [#allocation4], %s640
        %s642 = sand.u32 %s221, 1
        %s643 = smul.addr %s642, 32
        %s644 = scalar_lea.vmem [#allocation10], %s643
        // Predicated region
        $region97: #{tpu_custom_call.1} parent=79 // pred_check
          %p645 = pneg %p234
        $region98: #{tpu_custom_call.1} parent=79 // pred_check_branch
          %647 = sbr.rel (%p645) target = $region100
        $region99: #{tpu_custom_call.1} parent=79 // pred_region
          %648 = dma.done %s641, 512
        $region100: #{tpu_custom_call.1} parent=79 // pred_fallthru
          _
        %s649 = sand.u32 %s29, 1
        %s650 = scalar_lea.sflag [#allocation4], %s649
        %s651 = sand.u32 %s247, 1
        %s652 = scalar_lea.vmem [#allocation11], %s651
        // Predicated region
        $region101: #{tpu_custom_call.1} parent=79 // pred_check
          %p653 = pneg %p260
        $region102: #{tpu_custom_call.1} parent=79 // pred_check_branch
          %655 = sbr.rel (%p653) target = $region104
        $region103: #{tpu_custom_call.1} parent=79 // pred_region
          %656 = dma.done %s650, 16
        $region104: #{tpu_custom_call.1} parent=79 // pred_fallthru
          _
        // Predicated region
        $region105: #{tpu_custom_call.1} parent=79 // pred_check
          %p657 = pneg %p385
        $region106: #{tpu_custom_call.1} parent=79 // pred_check_branch
          %659 = sbr.rel (%p657) target = $region108
        $region107: #{tpu_custom_call.1} parent=79 // pred_region
          %660 = dma.done [#allocation7], 512
        $region108: #{tpu_custom_call.1} parent=79 // pred_fallthru
          _
        %p661 = pneg %p62
        %p662 = pneg %p59
        %p663 = pneg %p83
        %p664 = pneg %p80
        %p665 = pneg %p104
        %p666 = pneg %p101
        %p667 = scmp.lt.s32.totalorder %s34, 1
        %s668 = scalar_select %p667, %s34, 1
        %s669 = smul.addr %s668, 4
        %s670 = smul.addr %s669, 8
        %s671 = scalar_lea.vmem %s3, %s670
        %p672 = pneg %p130
        %p673 = pneg %p127
        %p674 = scmp.lt.s32.totalorder %s34, 1
        %s675 = scalar_select %p674, %s34, 1
        %s676 = scalar_lea.vmem %s4, %s675
        %p677 = pneg %p156
        %p678 = pneg %p153
        %s679 = sand.u32 %s29, 1
        %s680 = scalar_lea.sflag [#allocation4], %s679
        %s681 = sand.u32 %s169, 1
        %s682 = scalar_lea.vmem [#allocation8], %s681
        %p683 = pneg %p182
        %p684 = pneg %p179
        %s685 = sand.u32 %s29, 1
        %s686 = scalar_lea.sflag [#allocation4], %s685
        %s687 = sand.u32 %s195, 1
        %s688 = scalar_lea.vmem [#allocation9], %s687
        %p689 = pneg %p208
        %p690 = pneg %p205
        %s691 = sand.u32 %s29, 1
        %s692 = scalar_lea.sflag [#allocation4], %s691
        %s693 = sand.u32 %s221, 1
        %s694 = smul.addr %s693, 32
        %s695 = scalar_lea.vmem [#allocation10], %s694
        %p696 = pneg %p234
        %p697 = pneg %p231
        %s698 = sand.u32 %s29, 1
        %s699 = scalar_lea.sflag [#allocation4], %s698
        %s700 = sand.u32 %s247, 1
        %s701 = scalar_lea.vmem [#allocation11], %s700
        %p702 = pneg %p260
        %p703 = pneg %p257
        %p704 = scmp.lt.s32.totalorder %s34, 1
        %s705 = scalar_select %p704, %s34, 1
        %s706 = smul.addr %s705, 4
        %s707 = smul.addr %s706, 8
        %s708 = scalar_lea.vmem %s9, %s707
        %p709 = pneg %p286
        %p710 = pneg %p283
        %p711 = scmp.lt.s32.totalorder %s34, 1
        %s712 = scalar_select %p711, %s34, 1
        %s713 = scalar_lea.vmem %s10, %s712
        %p714 = pneg %p312
        %p715 = pneg %p309
        %p716 = scmp.lt.s32.totalorder %s34, 1
        %s717 = scalar_select %p716, %s34, 1
        %s718 = scalar_lea.vmem %s11, %s717
        %p719 = pneg %p338
        %p720 = pneg %p335
        %p721 = scmp.lt.s32.totalorder %s34, 1
        %s722 = scalar_select %p721, %s34, 1
        %s723 = scalar_lea.vmem %s12, %s722
        %p724 = pneg %p364
        %p725 = pneg %p361
        %p726 = pneg %p385
        %p727 = pneg %p382
        %p728 = pneg %p406
        %p729 = pneg %p403
        %p730 = pneg %p432
        %p731 = pneg %p429
        %s732 = smul.u32 2, %s33
        %p733 = scmp.lt.s32.totalorder %s34, 1
        %s734 = scalar_select %p733, %s34, 1
        %s735 = smul.addr %s734, 4
        %s736 = smul.addr %s735, 8
        %s737 = scalar_lea.vmem %s3, %s736
        %p738 = scmp.lt.s32.totalorder %s34, 1
        %s739 = scalar_select %p738, %s34, 1
        %s740 = scalar_lea.vmem %s4, %s739
        %p741 = scmp.lt.s32.totalorder %s34, 1
        %s742 = scalar_select %p741, %s34, 1
        %s743 = smul.addr %s742, 4
        %s744 = smul.addr %s743, 8
        %s745 = scalar_lea.vmem %s9, %s744
        %p746 = scmp.lt.s32.totalorder %s34, 1
        %s747 = scalar_select %p746, %s34, 1
        %s748 = scalar_lea.vmem %s10, %s747
        %p749 = scmp.lt.s32.totalorder %s34, 1
        %s750 = scalar_select %p749, %s34, 1
        %s751 = scalar_lea.vmem %s11, %s750
        %p752 = scmp.lt.s32.totalorder %s34, 1
        %s753 = scalar_select %p752, %s34, 1
        %s754 = scalar_lea.vmem %s12, %s753
        %s755 = smul.u32 2, %s33
        %p756 = scmp.eq.s32.totalorder %s34, 0
        // Predicated region
        $region109: #{tpu_custom_call.1} parent=79 // pred_check
          %p757 = pneg %p756
        $region110: #{tpu_custom_call.1} parent=79 // pred_check_branch
          %759 = sbr.rel (%p757) target = $region112
        $region111: #{tpu_custom_call.1} parent=79 // pred_region
          %v760 = vld [vmem:[#allocation3] sm:$0xff]
          %v761 = vld [vmem:[#allocation3 + $0x8] sm:$0xff]
          %v762 = vld [vmem:[%s1] sm:$0xff]
          %v763 = vld [vmem:[%s1 + $0x8] sm:$0xff]
          %v764 = vld [vmem:[%s1 + $0x10] sm:$0xff]
          %v765 = vld [vmem:[%s1 + $0x18] sm:$0xff]
          %v766 = vld [vmem:[%s1 + $0x20] sm:$0xff]
          %v767 = vld [vmem:[%s1 + $0x28] sm:$0xff]
          %v768 = vld [vmem:[%s1 + $0x30] sm:$0xff]
          %v769 = vld [vmem:[%s1 + $0x38] sm:$0xff]
          %v770 = vld [vmem:[#allocation6] sm:$0x1]
          %v772 = vlaneseq
          %v773 = vshrl.u32 %v772, 7
          %v774 = vsub.s32 0, %v773
          %v775 = vrot.slane %v770, %v774
          %vm777 = vcmask 523264
          %v779 = vsel %vm777, %v760, 0
          %v782 = vsel %vm777, %v761, 0
          %784 = vmatprep.subr.mxu0 0.0
          %785 = vmatpush1.msra.mxu0 %v762
          %786 = vmatprep.subr.mxu0 0.0
          %787 = vmatpush1.msra.mxu0 %v763
          %788 = vmatprep.subr.mxu0 0.0
          %789 = vmatpush1.msra.mxu0 %v764
          %790 = vmatprep.subr.mxu0 0.0
          %791 = vmatpush1.msra.mxu0 %v765
          %792 = vmatprep.subr.mxu0 0.0
          %793 = vmatpush1.msra.mxu0 %v766
          %794 = vmatprep.subr.mxu0 0.0
          %795 = vmatpush1.msra.mxu0 %v767
          %796 = vmatprep.subr.mxu0 0.0
          %797 = vmatpush1.msra.mxu0 %v768
          %798 = vmatprep.subr.mxu0 0.0
          %799 = vmatpush1.msra.mxu0 %v769
          %800 = vmatprep.subr.mxu0 0.0
          %801 = vmatpush1.msra.mxu0 0.0
          %802 = vmatprep.subr.mxu0 0.0
          %803 = vmatpush1.msra.mxu0 0.0
          %804 = vmatprep.subr.mxu0 0.0
          %805 = vmatpush1.msra.mxu0 0.0
          %806 = vmatprep.subr.mxu0 0.0
          %807 = vmatpush1.msra.mxu0 0.0
          %808 = vmatprep.subr.mxu0 0.0
          %809 = vmatpush1.msra.mxu0 0.0
          %810 = vmatprep.subr.mxu0 0.0
          %811 = vmatpush1.msra.mxu0 0.0
          %812 = vmatprep.subr.mxu0 0.0
          %813 = vmatpush1.msra.mxu0 0.0
          %814 = vmatprep.subr.mxu0 0.0
          %815 = vmatpush1.msra.mxu0 0.0
          %816 = vmatprep.subr.mxu0 0.0
          %817 = vmatpush1.msra.mxu0 0.0
          %818 = vmatprep.subr.mxu0 0.0
          %819 = vmatpush1.msra.mxu0 0.0
          %820 = vmatprep.subr.mxu0 0.0
          %821 = vmatpush1.msra.mxu0 0.0
          %822 = vmatprep.subr.mxu0 0.0
          %823 = vmatpush1.msra.mxu0 0.0
          %824 = vmatprep.subr.mxu0 0.0
          %825 = vmatpush1.msra.mxu0 0.0
          %826 = vmatprep.subr.mxu0 0.0
          %827 = vmatpush1.msra.mxu0 0.0
          %828 = vmatprep.subr.mxu0 0.0
          %829 = vmatpush1.msra.mxu0 0.0
          %830 = vmatprep.subr.mxu0 0.0
          %831 = vmatpush1.msra.mxu0 0.0
          %832 = vmatprep.subr.mxu0 0.0
          %833 = vmatpush1.msra.mxu0 0.0
          %834 = vmatprep.subr.mxu0 0.0
          %835 = vmatpush1.msra.mxu0 0.0
          %836 = vmatprep.subr.mxu0 0.0
          %837 = vmatpush1.msra.mxu0 0.0
          %838 = vmatprep.subr.mxu0 0.0
          %839 = vmatpush1.msra.mxu0 0.0
          %840 = vmatprep.subr.mxu0 0.0
          %841 = vmatpush1.msra.mxu0 0.0
          %842 = vmatprep.subr.mxu0 0.0
          %843 = vmatpush1.msra.mxu0 0.0
          %844 = vmatprep.subr.mxu0 0.0
          %845 = vmatpush1.msra.mxu0 0.0
          %846 = vmatprep.subr.mxu0 0.0
          %847 = vmatpush1.msra.mxu0 0.0
          %848 = vmatprep.mubr.f32.mxu0 0.0
          %849 = vmatmul.mubr.f32.gmra.mrb[0].mxu0 %v779
          %v850 = vpop.f32.mrb[0].mxu0
          %v851 = vadd.f32 %v775, %v850
          %v852 = vpop.f32.mrb[0].mxu0
          %853 = vmatprep.mubr.f32.mxu0 0.0
          %854 = vmatmul.mubr.f32.gmra.mrb[0].mxu0 %v782
          %v855 = vpop.f32.mrb[0].mxu0
          %v856 = vadd.f32 %v775, %v855
          %v857 = vpop.f32.mrb[0].mxu0
          %858 = vdwg.mxu0
          %vm859 = vcmask 261120
          %860 = vst.msk [vmem:[#allocation2] sm:$0xff] %vm859, %v851
          %861 = vst.msk [vmem:[#allocation2 + $0x8] sm:$0xff] %vm859, %v856
        $region112: #{tpu_custom_call.1} parent=79 // pred_fallthru
          _
        %v862 = vld [vmem:[#allocation2] sm:$0xff]
        %v863 = vld [vmem:[#allocation2 + $0x8] sm:$0xff]
        %v864 = vld [vmem:[%s737] sm:$0xff]
        %v865 = vld [vmem:[%s737 + $0x8] sm:$0xff]
        %v866 = vld [vmem:[%s737 + $0x10] sm:$0xff]
        %v867 = vld [vmem:[%s737 + $0x18] sm:$0xff]
        %v868 = vld [vmem:[%s740] sm:$0x1]
        %v870 = vlaneseq
        %v871 = vshrl.u32 %v870, 7
        %v872 = vsub.s32 0, %v871
        %v873 = vrot.slane %v868, %v872
        %vm875 = vcmask 261120
        %v877 = vsel %vm875, %v862, 0
        %v880 = vsel %vm875, %v863, 0
        %882 = vmatprep.subr.mxu0 0.0
        %883 = vmatpush1.msra.mxu0 %v864
        %884 = vmatprep.subr.mxu0 0.0
        %885 = vmatpush1.msra.mxu0 %v865
        %886 = vmatprep.subr.mxu0 0.0
        %887 = vmatpush1.msra.mxu0 %v866
        %888 = vmatprep.subr.mxu0 0.0
        %889 = vmatpush1.msra.mxu0 %v867
        %890 = vmatprep.subr.mxu0 0.0
        %891 = vmatpush1.msra.mxu0 0.0
        %892 = vmatprep.subr.mxu0 0.0
        %893 = vmatpush1.msra.mxu0 0.0
        %894 = vmatprep.subr.mxu0 0.0
        %895 = vmatpush1.msra.mxu0 0.0
        %896 = vmatprep.subr.mxu0 0.0
        %897 = vmatpush1.msra.mxu0 0.0
        %898 = vmatprep.subr.mxu0 0.0
        %899 = vmatpush1.msra.mxu0 0.0
        %900 = vmatprep.subr.mxu0 0.0
        %901 = vmatpush1.msra.mxu0 0.0
        %902 = vmatprep.subr.mxu0 0.0
        %903 = vmatpush1.msra.mxu0 0.0
        %904 = vmatprep.subr.mxu0 0.0
        %905 = vmatpush1.msra.mxu0 0.0
        %906 = vmatprep.subr.mxu0 0.0
        %907 = vmatpush1.msra.mxu0 0.0
        %908 = vmatprep.subr.mxu0 0.0
        %909 = vmatpush1.msra.mxu0 0.0
        %910 = vmatprep.subr.mxu0 0.0
        %911 = vmatpush1.msra.mxu0 0.0
        %912 = vmatprep.subr.mxu0 0.0
        %913 = vmatpush1.msra.mxu0 0.0
        %914 = vmatprep.subr.mxu0 0.0
        %915 = vmatpush1.msra.mxu0 0.0
        %916 = vmatprep.subr.mxu0 0.0
        %917 = vmatpush1.msra.mxu0 0.0
        %918 = vmatprep.subr.mxu0 0.0
        %919 = vmatpush1.msra.mxu0 0.0
        %920 = vmatprep.subr.mxu0 0.0
        %921 = vmatpush1.msra.mxu0 0.0
        %922 = vmatprep.subr.mxu0 0.0
        %923 = vmatpush1.msra.mxu0 0.0
        %924 = vmatprep.subr.mxu0 0.0
        %925 = vmatpush1.msra.mxu0 0.0
        %926 = vmatprep.subr.mxu0 0.0
        %927 = vmatpush1.msra.mxu0 0.0
        %928 = vmatprep.subr.mxu0 0.0
        %929 = vmatpush1.msra.mxu0 0.0
        %930 = vmatprep.subr.mxu0 0.0
        %931 = vmatpush1.msra.mxu0 0.0
        %932 = vmatprep.subr.mxu0 0.0
        %933 = vmatpush1.msra.mxu0 0.0
        %934 = vmatprep.subr.mxu0 0.0
        %935 = vmatpush1.msra.mxu0 0.0
        %936 = vmatprep.subr.mxu0 0.0
        %937 = vmatpush1.msra.mxu0 0.0
        %938 = vmatprep.subr.mxu0 0.0
        %939 = vmatpush1.msra.mxu0 0.0
        %940 = vmatprep.subr.mxu0 0.0
        %941 = vmatpush1.msra.mxu0 0.0
        %942 = vmatprep.subr.mxu0 0.0
        %943 = vmatpush1.msra.mxu0 0.0
        %944 = vmatprep.subr.mxu0 0.0
        %945 = vmatpush1.msra.mxu0 0.0
        %946 = vmatprep.mubr.f32.mxu0 0.0
        %947 = vmatmul.mubr.f32.gmra.mrb[0].mxu0 %v877
        %v948 = vpop.f32.mrb[0].mxu0
        %v949 = vadd.f32 %v873, %v948
        %v950 = vpop.f32.mrb[0].mxu0
        %951 = vmatprep.mubr.f32.mxu0 0.0
        %952 = vmatmul.mubr.f32.gmra.mrb[0].mxu0 %v880
        %v953 = vpop.f32.mrb[0].mxu0
        %v954 = vadd.f32 %v873, %v953
        %v955 = vpop.f32.mrb[0].mxu0
        %956 = vdwg.mxu0
        %v957 = vadd.f32 %v862, %v949
        %v958 = vadd.f32 %v863, %v954
        %v959 = vld [vmem:[%s627] sm:$0x1]
        %v960 = vld [vmem:[%s635] sm:$0x1]
        %v961 = vsel %vm875, %v957, 0.0
        %962 = vadd.xlane.f32.xlu0 %v961
        %v963 = vpop.xlane.xlu0 %962
        %v964 = vsel %vm875, %v958, 0.0
        %965 = vadd.xlane.f32.xlu0 %v964
        %v966 = vpop.xlane.xlu0 %965
        %v967 = vrcp.pop 32.0
        %v968 = vmul.f32 %v963, %v967
        %v969 = vmul.f32 %v966, %v967
        %v970 = vsub.f32 %v957, %v968
        %v971 = vsub.f32 %v958, %v969
        %v972 = vmul.f32 %v970, %v970
        %v973 = vmul.f32 %v971, %v971
        %v974 = vsel %vm875, %v972, 0.0
        %975 = vadd.xlane.f32.xlu0 %v974
        %v976 = vpop.xlane.xlu0 %975
        %v977 = vsel %vm875, %v973, 0.0
        %978 = vadd.xlane.f32.xlu0 %v977
        %v979 = vpop.xlane.xlu0 %978
        %v980 = vmul.f32 %v976, %v967
        %v981 = vmul.f32 %v979, %v967
        %v982 = vadd.f32 %v980, 1e-05
        %v983 = vadd.f32 %v981, 1e-05
        %v984 = vrsqrt.pop %v982
        %v985 = vrsqrt.pop %v983
        %v986 = vmul.f32 %v970, %v984
        %v987 = vmul.f32 %v971, %v985
        %v989 = vlaneseq
        %v990 = vshrl.u32 %v989, 7
        %v991 = vsub.s32 0, %v990
        %v992 = vrot.slane %v959, %v991
        %v994 = vmul.f32 %v986, %v992
        %v995 = vmul.f32 %v987, %v992
        %v997 = vlaneseq
        %v998 = vshrl.u32 %v997, 7
        %v999 = vsub.s32 0, %v998
        %v1000 = vrot.slane %v960, %v999
        %v1002 = vadd.f32 %v994, %v1000
        %v1003 = vadd.f32 %v995, %v1000
        %v1004 = vld [vmem:[%s644] sm:$0xff]
        %v1005 = vld [vmem:[%s644 + $0x8] sm:$0xff]
        %v1006 = vld [vmem:[%s644 + $0x10] sm:$0xff]
        %v1007 = vld [vmem:[%s644 + $0x18] sm:$0xff]
        %v1008 = vld [vmem:[%s652] sm:$0x1]
        %v1010 = vlaneseq
        %v1011 = vshrl.u32 %v1010, 7
        %v1012 = vsub.s32 0, %v1011
        %v1013 = vrot.slane %v1008, %v1012
        %v1016 = vsel %vm875, %v1002, 0
        %v1019 = vsel %vm875, %v1003, 0
        %1021 = vmatprep.subr.mxu0 0.0
        %1022 = vmatpush1.msra.mxu0 %v1004
        %1023 = vmatprep.subr.mxu0 0.0
        %1024 = vmatpush1.msra.mxu0 %v1005
        %1025 = vmatprep.subr.mxu0 0.0
        %1026 = vmatpush1.msra.mxu0 %v1006
        %1027 = vmatprep.subr.mxu0 0.0
        %1028 = vmatpush1.msra.mxu0 %v1007
        %1029 = vmatprep.subr.mxu0 0.0
        %1030 = vmatpush1.msra.mxu0 0.0
        %1031 = vmatprep.subr.mxu0 0.0
        %1032 = vmatpush1.msra.mxu0 0.0
        %1033 = vmatprep.subr.mxu0 0.0
        %1034 = vmatpush1.msra.mxu0 0.0
        %1035 = vmatprep.subr.mxu0 0.0
        %1036 = vmatpush1.msra.mxu0 0.0
        %1037 = vmatprep.subr.mxu0 0.0
        %1038 = vmatpush1.msra.mxu0 0.0
        %1039 = vmatprep.subr.mxu0 0.0
        %1040 = vmatpush1.msra.mxu0 0.0
        %1041 = vmatprep.subr.mxu0 0.0
        %1042 = vmatpush1.msra.mxu0 0.0
        %1043 = vmatprep.subr.mxu0 0.0
        %1044 = vmatpush1.msra.mxu0 0.0
        %1045 = vmatprep.subr.mxu0 0.0
        %1046 = vmatpush1.msra.mxu0 0.0
        %1047 = vmatprep.subr.mxu0 0.0
        %1048 = vmatpush1.msra.mxu0 0.0
        %1049 = vmatprep.subr.mxu0 0.0
        %1050 = vmatpush1.msra.mxu0 0.0
        %1051 = vmatprep.subr.mxu0 0.0
        %1052 = vmatpush1.msra.mxu0 0.0
        %1053 = vmatprep.subr.mxu0 0.0
        %1054 = vmatpush1.msra.mxu0 0.0
        %1055 = vmatprep.subr.mxu0 0.0
        %1056 = vmatpush1.msra.mxu0 0.0
        %1057 = vmatprep.subr.mxu0 0.0
        %1058 = vmatpush1.msra.mxu0 0.0
        %1059 = vmatprep.subr.mxu0 0.0
        %1060 = vmatpush1.msra.mxu0 0.0
        %1061 = vmatprep.subr.mxu0 0.0
        %1062 = vmatpush1.msra.mxu0 0.0
        %1063 = vmatprep.subr.mxu0 0.0
        %1064 = vmatpush1.msra.mxu0 0.0
        %1065 = vmatprep.subr.mxu0 0.0
        %1066 = vmatpush1.msra.mxu0 0.0
        %1067 = vmatprep.subr.mxu0 0.0
        %1068 = vmatpush1.msra.mxu0 0.0
        %1069 = vmatprep.subr.mxu0 0.0
        %1070 = vmatpush1.msra.mxu0 0.0
        %1071 = vmatprep.subr.mxu0 0.0
        %1072 = vmatpush1.msra.mxu0 0.0
        %1073 = vmatprep.subr.mxu0 0.0
        %1074 = vmatpush1.msra.mxu0 0.0
        %1075 = vmatprep.subr.mxu0 0.0
        %1076 = vmatpush1.msra.mxu0 0.0
        %1077 = vmatprep.subr.mxu0 0.0
        %1078 = vmatpush1.msra.mxu0 0.0
        %1079 = vmatprep.subr.mxu0 0.0
        %1080 = vmatpush1.msra.mxu0 0.0
        %1081 = vmatprep.subr.mxu0 0.0
        %1082 = vmatpush1.msra.mxu0 0.0
        %1083 = vmatprep.subr.mxu0 0.0
        %1084 = vmatpush1.msra.mxu0 0.0
        %1085 = vmatprep.mubr.f32.mxu0 0.0
        %1086 = vmatmul.mubr.f32.gmra.mrb[0].mxu0 %v1016
        %v1087 = vpop.f32.mrb[0].mxu0
        %v1088 = vadd.f32 %v1013, %v1087
        %v1089 = vpop.f32.mrb[0].mxu0
        %1090 = vmatprep.mubr.f32.mxu0 0.0
        %1091 = vmatmul.mubr.f32.gmra.mrb[0].mxu0 %v1019
        %v1092 = vpop.f32.mrb[0].mxu0
        %v1093 = vadd.f32 %v1013, %v1092
        %v1094 = vpop.f32.mrb[0].mxu0
        %1095 = vdwg.mxu0
        %v1096 = vmax.f32 %v1088, 0.0
        %v1097 = vmax.f32 %v1093, 0.0
        %v1098 = vld [vmem:[%s745] sm:$0xff]
        %v1099 = vld [vmem:[%s745 + $0x8] sm:$0xff]
        %v1100 = vld [vmem:[%s745 + $0x10] sm:$0xff]
        %v1101 = vld [vmem:[%s745 + $0x18] sm:$0xff]
        %v1102 = vld [vmem:[%s748] sm:$0x1]
        %v1104 = vlaneseq
        %v1105 = vshrl.u32 %v1104, 7
        %v1106 = vsub.s32 0, %v1105
        %v1107 = vrot.slane %v1102, %v1106
        %v1110 = vsel %vm875, %v1096, 0
        %v1113 = vsel %vm875, %v1097, 0
        %1115 = vmatprep.subr.mxu0 0.0
        %1116 = vmatpush1.msra.mxu0 %v1098
        %1117 = vmatprep.subr.mxu0 0.0
        %1118 = vmatpush1.msra.mxu0 %v1099
        %1119 = vmatprep.subr.mxu0 0.0
        %1120 = vmatpush1.msra.mxu0 %v1100
        %1121 = vmatprep.subr.mxu0 0.0
        %1122 = vmatpush1.msra.mxu0 %v1101
        %1123 = vmatprep.subr.mxu0 0.0
        %1124 = vmatpush1.msra.mxu0 0.0
        %1125 = vmatprep.subr.mxu0 0.0
        %1126 = vmatpush1.msra.mxu0 0.0
        %1127 = vmatprep.subr.mxu0 0.0
        %1128 = vmatpush1.msra.mxu0 0.0
        %1129 = vmatprep.subr.mxu0 0.0
        %1130 = vmatpush1.msra.mxu0 0.0
        %1131 = vmatprep.subr.mxu0 0.0
        %1132 = vmatpush1.msra.mxu0 0.0
        %1133 = vmatprep.subr.mxu0 0.0
        %1134 = vmatpush1.msra.mxu0 0.0
        %1135 = vmatprep.subr.mxu0 0.0
        %1136 = vmatpush1.msra.mxu0 0.0
        %1137 = vmatprep.subr.mxu0 0.0
        %1138 = vmatpush1.msra.mxu0 0.0
        %1139 = vmatprep.subr.mxu0 0.0
        %1140 = vmatpush1.msra.mxu0 0.0
        %1141 = vmatprep.subr.mxu0 0.0
        %1142 = vmatpush1.msra.mxu0 0.0
        %1143 = vmatprep.subr.mxu0 0.0
        %1144 = vmatpush1.msra.mxu0 0.0
        %1145 = vmatprep.subr.mxu0 0.0
        %1146 = vmatpush1.msra.mxu0 0.0
        %1147 = vmatprep.subr.mxu0 0.0
        %1148 = vmatpush1.msra.mxu0 0.0
        %1149 = vmatprep.subr.mxu0 0.0
        %1150 = vmatpush1.msra.mxu0 0.0
        %1151 = vmatprep.subr.mxu0 0.0
        %1152 = vmatpush1.msra.mxu0 0.0
        %1153 = vmatprep.subr.mxu0 0.0
        %1154 = vmatpush1.msra.mxu0 0.0
        %1155 = vmatprep.subr.mxu0 0.0
        %1156 = vmatpush1.msra.mxu0 0.0
        %1157 = vmatprep.subr.mxu0 0.0
        %1158 = vmatpush1.msra.mxu0 0.0
        %1159 = vmatprep.subr.mxu0 0.0
        %1160 = vmatpush1.msra.mxu0 0.0
        %1161 = vmatprep.subr.mxu0 0.0
        %1162 = vmatpush1.msra.mxu0 0.0
        %1163 = vmatprep.subr.mxu0 0.0
        %1164 = vmatpush1.msra.mxu0 0.0
        %1165 = vmatprep.subr.mxu0 0.0
        %1166 = vmatpush1.msra.mxu0 0.0
        %1167 = vmatprep.subr.mxu0 0.0
        %1168 = vmatpush1.msra.mxu0 0.0
        %1169 = vmatprep.subr.mxu0 0.0
        %1170 = vmatpush1.msra.mxu0 0.0
        %1171 = vmatprep.subr.mxu0 0.0
        %1172 = vmatpush1.msra.mxu0 0.0
        %1173 = vmatprep.subr.mxu0 0.0
        %1174 = vmatpush1.msra.mxu0 0.0
        %1175 = vmatprep.subr.mxu0 0.0
        %1176 = vmatpush1.msra.mxu0 0.0
        %1177 = vmatprep.subr.mxu0 0.0
        %1178 = vmatpush1.msra.mxu0 0.0
        %1179 = vmatprep.mubr.f32.mxu0 0.0
        %1180 = vmatmul.mubr.f32.gmra.mrb[0].mxu0 %v1110
        %v1181 = vpop.f32.mrb[0].mxu0
        %v1182 = vadd.f32 %v1107, %v1181
        %v1183 = vpop.f32.mrb[0].mxu0
        %1184 = vmatprep.mubr.f32.mxu0 0.0
        %1185 = vmatmul.mubr.f32.gmra.mrb[0].mxu0 %v1113
        %v1186 = vpop.f32.mrb[0].mxu0
        %v1187 = vadd.f32 %v1107, %v1186
        %v1188 = vpop.f32.mrb[0].mxu0
        %1189 = vdwg.mxu0
        %v1190 = vadd.f32 %v1002, %v1182
        %v1191 = vadd.f32 %v1003, %v1187
        %v1192 = vld [vmem:[%s751] sm:$0x1]
        %v1193 = vld [vmem:[%s754] sm:$0x1]
        %v1194 = vsel %vm875, %v1190, 0.0
        %1195 = vadd.xlane.f32.xlu0 %v1194
        %v1196 = vpop.xlane.xlu0 %1195
        %v1197 = vsel %vm875, %v1191, 0.0
        %1198 = vadd.xlane.f32.xlu0 %v1197
        %v1199 = vpop.xlane.xlu0 %1198
        %v1200 = vmul.f32 %v1196, %v967
        %v1201 = vmul.f32 %v1199, %v967
        %v1202 = vsub.f32 %v1190, %v1200
        %v1203 = vsub.f32 %v1191, %v1201
        %v1204 = vmul.f32 %v1202, %v1202
        %v1205 = vmul.f32 %v1203, %v1203
        %v1206 = vsel %vm875, %v1204, 0.0
        %1207 = vadd.xlane.f32.xlu0 %v1206
        %v1208 = vpop.xlane.xlu0 %1207
        %v1209 = vsel %vm875, %v1205, 0.0
        %1210 = vadd.xlane.f32.xlu0 %v1209
        %v1211 = vpop.xlane.xlu0 %1210
        %v1212 = vmul.f32 %v1208, %v967
        %v1213 = vmul.f32 %v1211, %v967
        %v1214 = vadd.f32 %v1212, 1e-05
        %v1215 = vadd.f32 %v1213, 1e-05
        %v1216 = vrsqrt.pop %v1214
        %v1217 = vrsqrt.pop %v1215
        %v1218 = vmul.f32 %v1202, %v1216
        %v1219 = vmul.f32 %v1203, %v1217
        %v1221 = vlaneseq
        %v1222 = vshrl.u32 %v1221, 7
        %v1223 = vsub.s32 0, %v1222
        %v1224 = vrot.slane %v1192, %v1223
        %v1226 = vmul.f32 %v1218, %v1224
        %v1227 = vmul.f32 %v1219, %v1224
        %v1229 = vlaneseq
        %v1230 = vshrl.u32 %v1229, 7
        %v1231 = vsub.s32 0, %v1230
        %v1232 = vrot.slane %v1193, %v1231
        %v1234 = vadd.f32 %v1226, %v1232
        %v1235 = vadd.f32 %v1227, %v1232
        %1236 = vst.msk [vmem:[#allocation2] sm:$0xff] %vm875, %v1234
        %1237 = vst.msk [vmem:[#allocation2 + $0x8] sm:$0xff] %vm875, %v1235
        %p1238 = scmp.eq.s32.totalorder %s34, 1
        // Predicated region
        $region113: #{tpu_custom_call.1} parent=79 // pred_check
          %p1239 = pneg %p1238
        $region114: #{tpu_custom_call.1} parent=79 // pred_check_branch
          %1241 = sbr.rel (%p1239) target = $region116
        $region115: #{tpu_custom_call.1} parent=79 // pred_region
          %v1242 = vld [vmem:[#allocation12] sm:$0xff]
          %v1243 = vld [vmem:[#allocation12 + $0x8] sm:$0xff]
          %v1244 = vld [vmem:[#allocation12 + $0x10] sm:$0xff]
          %v1245 = vld [vmem:[#allocation12 + $0x18] sm:$0xff]
          %v1246 = vld [vmem:[%s14] sm:$0x1]
          %v1248 = vlaneseq
          %v1249 = vshrl.u32 %v1248, 7
          %v1250 = vsub.s32 0, %v1249
          %v1251 = vrot.slane %v1246, %v1250
          %v1254 = vsel %vm875, %v1234, 0
          %v1257 = vsel %vm875, %v1235, 0
          %1259 = vmatprep.subr.mxu0 0.0
          %1260 = vmatpush1.msra.mxu0 %v1242
          %1261 = vmatprep.subr.mxu0 0.0
          %1262 = vmatpush1.msra.mxu0 %v1243
          %1263 = vmatprep.subr.mxu0 0.0
          %1264 = vmatpush1.msra.mxu0 %v1244
          %1265 = vmatprep.subr.mxu0 0.0
          %1266 = vmatpush1.msra.mxu0 %v1245
          %1267 = vmatprep.subr.mxu0 0.0
          %1268 = vmatpush1.msra.mxu0 0.0
          %1269 = vmatprep.subr.mxu0 0.0
          %1270 = vmatpush1.msra.mxu0 0.0
          %1271 = vmatprep.subr.mxu0 0.0
          %1272 = vmatpush1.msra.mxu0 0.0
          %1273 = vmatprep.subr.mxu0 0.0
          %1274 = vmatpush1.msra.mxu0 0.0
          %1275 = vmatprep.subr.mxu0 0.0
          %1276 = vmatpush1.msra.mxu0 0.0
          %1277 = vmatprep.subr.mxu0 0.0
          %1278 = vmatpush1.msra.mxu0 0.0
          %1279 = vmatprep.subr.mxu0 0.0
          %1280 = vmatpush1.msra.mxu0 0.0
          %1281 = vmatprep.subr.mxu0 0.0
          %1282 = vmatpush1.msra.mxu0 0.0
          %1283 = vmatprep.subr.mxu0 0.0
          %1284 = vmatpush1.msra.mxu0 0.0
          %1285 = vmatprep.subr.mxu0 0.0
          %1286 = vmatpush1.msra.mxu0 0.0
          %1287 = vmatprep.subr.mxu0 0.0
          %1288 = vmatpush1.msra.mxu0 0.0
          %1289 = vmatprep.subr.mxu0 0.0
          %1290 = vmatpush1.msra.mxu0 0.0
          %1291 = vmatprep.subr.mxu0 0.0
          %1292 = vmatpush1.msra.mxu0 0.0
          %1293 = vmatprep.subr.mxu0 0.0
          %1294 = vmatpush1.msra.mxu0 0.0
          %1295 = vmatprep.subr.mxu0 0.0
          %1296 = vmatpush1.msra.mxu0 0.0
          %1297 = vmatprep.subr.mxu0 0.0
          %1298 = vmatpush1.msra.mxu0 0.0
          %1299 = vmatprep.subr.mxu0 0.0
          %1300 = vmatpush1.msra.mxu0 0.0
          %1301 = vmatprep.subr.mxu0 0.0
          %1302 = vmatpush1.msra.mxu0 0.0
          %1303 = vmatprep.subr.mxu0 0.0
          %1304 = vmatpush1.msra.mxu0 0.0
          %1305 = vmatprep.subr.mxu0 0.0
          %1306 = vmatpush1.msra.mxu0 0.0
          %1307 = vmatprep.subr.mxu0 0.0
          %1308 = vmatpush1.msra.mxu0 0.0
          %1309 = vmatprep.subr.mxu0 0.0
          %1310 = vmatpush1.msra.mxu0 0.0
          %1311 = vmatprep.subr.mxu0 0.0
          %1312 = vmatpush1.msra.mxu0 0.0
          %1313 = vmatprep.subr.mxu0 0.0
          %1314 = vmatpush1.msra.mxu0 0.0
          %1315 = vmatprep.subr.mxu0 0.0
          %1316 = vmatpush1.msra.mxu0 0.0
          %1317 = vmatprep.subr.mxu0 0.0
          %1318 = vmatpush1.msra.mxu0 0.0
          %1319 = vmatprep.subr.mxu0 0.0
          %1320 = vmatpush1.msra.mxu0 0.0
          %1321 = vmatprep.subr.mxu0 0.0
          %1322 = vmatpush1.msra.mxu0 0.0
          %1323 = vmatprep.mubr.f32.mxu0 0.0
          %1324 = vmatmul.mubr.f32.gmra.mrb[0].mxu0 %v1254
          %v1325 = vpop.f32.mrb[0].mxu0
          %v1326 = vadd.f32 %v1251, %v1325
          %v1327 = vpop.f32.mrb[0].mxu0
          %1328 = vmatprep.mubr.f32.mxu0 0.0
          %1329 = vmatmul.mubr.f32.gmra.mrb[0].mxu0 %v1257
          %v1330 = vpop.f32.mrb[0].mxu0
          %v1331 = vadd.f32 %v1251, %v1330
          %v1332 = vpop.f32.mrb[0].mxu0
          %1333 = vdwg.mxu0
          %1334 = vst [vmem:[#allocation13] sm:$0xff] %v1326
          %1335 = vst [vmem:[#allocation13 + $0x8] sm:$0xff] %v1331
        $region116: #{tpu_custom_call.1} parent=79 // pred_fallthru
          _
        // Predicated region
        $region117: #{tpu_custom_call.1} parent=79 // pred_check
          %p1336 = pneg %p429
        $region118: #{tpu_custom_call.1} parent=79 // pred_check_branch
          %1338 = sbr.rel (%p1336) target = $region120
        $region119: #{tpu_custom_call.1} parent=79 // pred_region
          %s1339 = smul.u32 2, %s33
          %s1341 = ssub.s32 256, 256
          %1342 = vsyncadd [#allocation5], %s1341
          %s1343 = smul.addr %s1339, 128
          %s1344 = scalar_lea.hbm %s15, %s1343
          %s1345 = sshll.u32 [#allocation13], 4
          %s1346 = int_to_ptr.vmem [resolvable:$true] %s1345
          %1351 = dma.vmem_to_hbm [thread:$0]  %s1346, 256, %s1344, [#allocation5], 128, 128, 8
        $region120: #{tpu_custom_call.1} parent=79 // pred_fallthru
          _
        // Predicated region
        $region121: #{tpu_custom_call.1} parent=79 // pred_check
          %p1352 = pneg %p429
        $region122: #{tpu_custom_call.1} parent=79 // pred_check_branch
          %1354 = sbr.rel (%p1352) target = $region124
        $region123: #{tpu_custom_call.1} parent=79 // pred_region
          %1355 = dma.done [#allocation5], 256
        $region124: #{tpu_custom_call.1} parent=79 // pred_fallthru
          _
      $region80: #{tpu_custom_call.1} parent=5 // pred_fallthru
        _
      %p1356 = scmp.le.s32.totalorder 2, %s24
      // Predicated region
      $region125: #{tpu_custom_call.1} parent=5 // pred_check
        %p1357 = pneg %p1356
      $region126: #{tpu_custom_call.1} parent=5 // pred_check_branch
        %1359 = sbr.rel (%p1357) target = $region128
      $region127: #{tpu_custom_call.1} parent=5 // pred_region
        %s1360 = ssub.s32 %s24, 2
      $region128: #{tpu_custom_call.1} parent=5 // pred_fallthru
        _
    $region6: #{tpu_custom_call.1} parent=1 // loop_footer
      %s28 = sadd.s32 1, %s24
    $region7: #{tpu_custom_call.1} parent=1 // loop_footer_branch
      %23 = sbr.rel target = $region3
    $region8: #{tpu_custom_call.1} parent=1 // loop_exit
      _
    %1361 = vsyncpa [#allocation4], 1
    %s1362 = scalar_lea.sflag [#allocation4], 1
    %1363 = vsyncpa %s1362, 1
    %1364 = vsyncpa [#allocation7], 1
    %1365 = vsyncpa [#allocation5], 1
    %s1366 = scalar_lea.sflag [#allocation5], 1
    %1367 = vsyncpa %s1366, 1

</llo_original>
